<compile_context>
chip_gen: v7x
topology: tpu7x:2x2x1
jax: 0.10.0
libtpu: 0.0.40
codegen_flags: <defaults>
</compile_context>

<pallas_src>
import functools
import math

import jax
import jax.numpy as jnp
from jax import lax
from jax.experimental import pallas as pl
from jax.experimental.pallas import tpu as pltpu


OUT_PAD = 128        # lane-dense classifier output width (real logits sliced after)
NEG_INF = -1e30      # additive attention-mask value (kept in f32)


def _mm(a, b):
    """a @ b on the MXU: bf16 operands, f32 accumulation."""
    return lax.dot_general(a.astype(jnp.bfloat16), b.astype(jnp.bfloat16),
                           (((1,), (0,)), ((), ())),
                           preferred_element_type=jnp.float32)


def _mm_t(a, b):
    """a @ b.T via transposed contraction (no materialized transpose of b)."""
    # NOTE(v5e): may lower with an implicit transpose; acceptable at these sizes.
    return lax.dot_general(a.astype(jnp.bfloat16), b.astype(jnp.bfloat16),
                           (((1,), (1,)), ((), ())),
                           preferred_element_type=jnp.float32)


# ---------------------------------------------------------------------------
# Stage 1: gnn1 + bn1, gnn2 + bn2 + relu         (grid: one graph per step)
# ---------------------------------------------------------------------------
def _gnn_kernel(x_ref, bias_ref, w1_ref, b1_ref, w2_ref, b2_ref, h_ref,
                *, f1, f2):
    x = x_ref[0]          # (N, IN)   f32
    bias = bias_ref[0]    # (N, N)    additive mask: 0 on edges, -1e30 elsewhere

    def transformer_conv_bn(h, w_ref, b_ref, fout, apply_relu):
        # Fused Q/K/V/skip projection: one (N, Fin) @ (Fin, 4*Fout) matmul.
        qkvs = _mm(h, w_ref[...]) + b_ref[...]                 # (N, 4*Fout) f32
        q = qkvs[:, 0 * fout:1 * fout]
        k = qkvs[:, 1 * fout:2 * fout]
        v = qkvs[:, 2 * fout:3 * fout]
        skip = qkvs[:, 3 * fout:4 * fout]

        # Masked softmax over incoming neighbours (f32 math, additive mask).
        scores = _mm_t(q, k) * (1.0 / math.sqrt(fout)) + bias  # (N, N)
        m = jnp.max(scores, axis=-1, keepdims=True)
        e = jnp.exp(scores - m)
        s = jnp.sum(e, axis=-1, keepdims=True)
        inv = pl.reciprocal(s, approx=True)                    # EUP slot, ~free
        # Nodes with no incoming edge: m stays ~NEG_INF -> aggregate to zero.
        attn = e * jnp.where(m > 0.5 * NEG_INF, inv, 0.0)
        out = _mm(attn, v) + skip

        # BatchNorm1d with training-mode batch stats (gamma=1, beta=0, eps=1e-5).
        # TODO(synk): eval-mode BN would need running_mean/var + learned affine.
        mean = jnp.mean(out, axis=0, keepdims=True)
        var = jnp.mean((out - mean) ** 2, axis=0, keepdims=True)
        out = (out - mean) * lax.rsqrt(var + 1e-5)
        if apply_relu:
            out = jnp.maximum(out, 0.0)
        return out

    h = transformer_conv_bn(x, w1_ref, b1_ref, f1, apply_relu=False)  # gnn1+bn1
    h = transformer_conv_bn(h, w2_ref, b2_ref, f2, apply_relu=True)   # gnn2+bn2+relu
    h_ref[0] = h                                                      # dropout2 = id


# ---------------------------------------------------------------------------
# Stage 2: per-group Gram (diagonal blocks) + locally + nl + classify
#          (grid: one block of `rb` groups per step)
# ---------------------------------------------------------------------------
def _head_kernel(x3_ref, wlf_ref, blf_ref, wnl_ref, bnl_ref, wcls_ref, o_ref,
                 gram_ref, *, c):
    x3 = x3_ref[...].astype(jnp.bfloat16)                      # (rb, C, 7)

    # torch.bmm(x, x.permute(0, 2, 1)) -- diagonal (C, C) blocks only.
    gram_ref[...] = jnp.einsum('rct,rdt->rcd', x3, x3,
                               preferred_element_type=jnp.float32)

    # x.view(-1, C*C) @ W_lf without an in-kernel flatten: split the
    # contraction over the first Gram index; each term is a ref-sliced
    # (rb, C) @ (C, LF) matmul (C small MXU pushes, zero vector relayouts).
    rb = x3.shape[0]
    lf = wlf_ref.shape[1]
    acc = jnp.zeros((rb, lf), jnp.float32)
    for i in range(c):
        acc = acc + _mm(gram_ref[:, i, :], wlf_ref[i * c:(i + 1) * c, :])

    # TODO(synk): Multi_layer_locally_feature_extraction / Nonlinear_feature_interaction
    #             definitions not provided; approximated as Linear+ReLU layers.
    hd = jnp.maximum(acc + blf_ref[...], 0.0)                          # locally
    hd = jnp.maximum(_mm(hd, wnl_ref[...]) + bnl_ref[...], 0.0)        # nl
    # dropout3 = identity; classify (weights zero-padded to 128 lanes ->
    # unmasked, lane-dense store).
    o_ref[...] = _mm(hd, wcls_ref[...])                                # (rb, 128)


# ---------------------------------------------------------------------------
# Wrapper
# ---------------------------------------------------------------------------
def gecnvnet_forward(x, adj, params):
    """Batched forward.

    x:   (B, N, 10)  node features, one independent graph per batch entry
    adj: (B, N, N)   dense 0/1 adjacency, adj[b, target, source]
    Returns (B, N // 7, 2) logits (each graph == one forward of the torch module).
    """
    bsz, n, in_dim = x.shape
    assert n % 7 == 0
    f1 = params["b_qkvs1"].shape[1] // 4
    f2 = params["b_qkvs2"].shape[1] // 4
    groups = n // 7
    lf_out = params["w_lf"].shape[1]
    nl_out = params["w_nl"].shape[1]
    num_classes = params["w_cls"].shape[1]

    # ---- wrapper-side prep (cheap XLA ops, done once per call) ----------
    bf16 = jnp.bfloat16
    w1 = params["w_qkvs1"].astype(bf16)
    w2 = params["w_qkvs2"].astype(bf16)
    w_lf = params["w_lf"].astype(bf16)
    w_nl = params["w_nl"].astype(bf16)
    b1, b2 = params["b_qkvs1"], params["b_qkvs2"]
    b_lf, b_nl = params["b_lf"], params["b_nl"]
    w_cls_pad = jnp.zeros((nl_out, OUT_PAD), bf16).at[:, :num_classes].set(
        params["w_cls"].astype(bf16))
    adj_bias = jnp.where(adj > 0, 0.0, NEG_INF).astype(jnp.float32)

    # ---- stage 1: GNN layers, one graph per grid step --------------------
    gnn = functools.partial(_gnn_kernel, f1=f1, f2=f2)
    h = pl.pallas_call(
        gnn,
        out_shape=jax.ShapeDtypeStruct((bsz, n, f2), jnp.float32),
        grid=(bsz,),
        in_specs=[
            pl.BlockSpec((1, n, in_dim), lambda g: (g, 0, 0)),
            pl.BlockSpec((1, n, n), lambda g: (g, 0, 0)),
            pl.BlockSpec((in_dim, 4 * f1), lambda g: (0, 0)),   # weights resident
            pl.BlockSpec((1, 4 * f1), lambda g: (0, 0)),
            pl.BlockSpec((f1, 4 * f2), lambda g: (0, 0)),
            pl.BlockSpec((1, 4 * f2), lambda g: (0, 0)),
        ],
        out_specs=pl.BlockSpec((1, n, f2), lambda g: (g, 0, 0)),
        compiler_params=pltpu.CompilerParams(dimension_semantics=("parallel",)),
    )(x, adj_bias, w1, b1, w2, b2)

    # torch: x.reshape(N // 7, -1, 7) is a flat row-major reshape -> free XLA
    # layout plumbing here instead of unrolled slices inside the kernel.
    rows = bsz * groups
    x3 = h.reshape(rows, f2, 7)

    # ---- stage 2: Gram + head MLP, rb groups per grid step ---------------
    rb = 8 if rows % 8 == 0 else rows      # full (8, 128) output tiles when possible
    head = functools.partial(_head_kernel, c=f2)
    logits = pl.pallas_call(
        head,
        out_shape=jax.ShapeDtypeStruct((rows, OUT_PAD), jnp.float32),
        grid=(rows // rb,),
        in_specs=[
            pl.BlockSpec((rb, f2, 7), lambda r: (r, 0, 0)),
            pl.BlockSpec((f2 * f2, lf_out), lambda r: (0, 0)),  # weights resident
            pl.BlockSpec((1, lf_out), lambda r: (0, 0)),
            pl.BlockSpec((lf_out, nl_out), lambda r: (0, 0)),
            pl.BlockSpec((1, nl_out), lambda r: (0, 0)),
            pl.BlockSpec((nl_out, OUT_PAD), lambda r: (0, 0)),
        ],
        out_specs=pl.BlockSpec((rb, OUT_PAD), lambda r: (r, 0)),
        scratch_shapes=[pltpu.VMEM((rb, f2, f2), jnp.float32)],
        compiler_params=pltpu.CompilerParams(dimension_semantics=("parallel",)),
    )(x3, w_lf, b_lf, w_nl, b_nl, w_cls_pad)

    return logits[:, :num_classes].reshape(bsz, groups, num_classes)


# ---------------------------------------------------------------------------
# Deterministic parameter construction (Q/K/V/skip pre-concatenated)
# ---------------------------------------------------------------------------
def _linear_params(key, fin, fout, bias=True):
    kw, kb = jax.random.split(key)
    w = jax.random.normal(kw, (fin, fout), jnp.float32) * (1.0 / math.sqrt(fin))
    b = (jax.random.normal(kb, (1, fout), jnp.float32) * 0.01) if bias else None
    return w, b


def make_params(key, in_dim, ge_dim, lf_out, nl_out):
    keys = jax.random.split(key, 16)
    params = {}
    for name, fin, fout, koff in (("1", in_dim, ge_dim[0], 0),
                                  ("2", ge_dim[0], ge_dim[1], 4)):
        ws, bs = [], []
        for t in range(4):  # q, k, v, skip
            w, b = _linear_params(keys[koff + t], fin, fout)
            ws.append(w)
            bs.append(b)
        params["w_qkvs" + name] = jnp.concatenate(ws, axis=1)   # (Fin, 4*Fout)
        params["b_qkvs" + name] = jnp.concatenate(bs, axis=1)   # (1, 4*Fout)
    lf_in = ge_dim[1] * ge_dim[1]
    params["w_lf"], params["b_lf"] = _linear_params(keys[8], lf_in, lf_out)
    params["w_nl"], params["b_nl"] = _linear_params(keys[9], lf_out, nl_out)
    params["w_cls"], _ = _linear_params(keys[10], nl_out, 2, bias=False)
    return params


# ---------------------------------------------------------------------------
if __name__ == "__main__":
    key = jax.random.PRNGKey(0)
    kx, kp = jax.random.split(key)

    B = 8             # graphs per batch (amortizes launch overhead, fills the grid)
    N = 14            # nodes per graph (multiple of 7 -> 2 groups per graph)
    IN_DIM = 10       # TransformerConv(10, GE_dim[0])
    GE_DIM = (16, 8)
    LF_OUT = 32
    NL_OUT = 16

    x = jax.random.normal(kx, (B, N, IN_DIM), jnp.float32)

    # edge_index equivalent: ring graph (both directions) + self loops, dense,
    # identical topology for every graph in the batch.
    idx = jnp.arange(N)
    src = jnp.concatenate([idx, (idx + 1) % N, idx])
    dst = jnp.concatenate([(idx + 1) % N, idx, idx])
    adj1 = jnp.zeros((N, N), jnp.float32).at[dst, src].set(1.0)  # adj[target, source]
    adj = jnp.broadcast_to(adj1, (B, N, N))

    params = make_params(kp, IN_DIM, GE_DIM, LF_OUT, NL_OUT)

    fwd = jax.jit(gecnvnet_forward)
    out = jax.block_until_ready(fwd(x, adj, params))
    assert out.shape == (B, N // 7, 2)
    assert bool(jnp.all(jnp.isfinite(out)))
    print("KERNEL_OK")
</pallas_src>

<mosaic_0001>
module attributes {stable_mosaic.version = 11 : i64} {
  func.func @_head_kernel(%arg0: i32, %arg1: memref<8x8x7xf32, #tpu.memory_space<vmem>>, %arg2: memref<64x32xbf16, #tpu.memory_space<vmem>>, %arg3: memref<1x32xf32, #tpu.memory_space<vmem>>, %arg4: memref<32x16xbf16, #tpu.memory_space<vmem>>, %arg5: memref<1x16xf32, #tpu.memory_space<vmem>>, %arg6: memref<16x128xbf16, #tpu.memory_space<vmem>>, %arg7: memref<8x128xf32, #tpu.memory_space<vmem>>, %arg8: memref<8x8x8xf32, #tpu.memory_space<vmem>>) attributes {dimension_semantics = [#tpu.dimension_semantics<parallel>], iteration_bounds = array<i64: 2>, scalar_prefetch = 0 : i64, scratch_operands = 1 : i64, tpu.core_type = #tpu.core_type<tc>, window_params = [{transform_indices = @transform_0, window_bounds = array<i64: 8, 8, 7>}, {pipeline_mode = #tpu.pipeline_mode<synchronous>, transform_indices = @transform_1, window_bounds = array<i64: 64, 32>}, {pipeline_mode = #tpu.pipeline_mode<synchronous>, transform_indices = @transform_2, window_bounds = array<i64: 1, 32>}, {pipeline_mode = #tpu.pipeline_mode<synchronous>, transform_indices = @transform_3, window_bounds = array<i64: 32, 16>}, {pipeline_mode = #tpu.pipeline_mode<synchronous>, transform_indices = @transform_4, window_bounds = array<i64: 1, 16>}, {pipeline_mode = #tpu.pipeline_mode<synchronous>, transform_indices = @transform_5, window_bounds = array<i64: 16, 128>}, {transform_indices = @transform_6, window_bounds = array<i64: 8, 128>}]} {
    %c0 = arith.constant 0 : index
    %c0_0 = arith.constant 0 : index
    %c0_1 = arith.constant 0 : index
    %0 = vector.load %arg1[%c0, %c0_0, %c0_1] : memref<8x8x7xf32, #tpu.memory_space<vmem>>, vector<8x8x7xf32>
    %1 = arith.truncf %0 : vector<8x8x7xf32> to vector<8x8x7xbf16>
    "tpu.trace_start"() <{level = 10 : i32, message = "rct,rdt->rcd"}> : () -> ()
    %cst = arith.constant dense<0.000000e+00> : vector<8x8x8xf32>
    %2 = tpu.matmul %1, %1, %cst {dimension_numbers = #tpu.dot_dimension_numbers<[2], [2], [1], [1], [0, 0, 0, 1, 1, 1], [0], [0]>} : vector<8x8x7xbf16>, vector<8x8x7xbf16>, vector<8x8x8xf32> -> vector<8x8x8xf32>
    "tpu.trace_stop"() : () -> ()
    %c0_2 = arith.constant 0 : index
    %c0_3 = arith.constant 0 : index
    %c0_4 = arith.constant 0 : index
    %3 = vector.load %arg8[%c0_2, %c0_3, %c0_4] : memref<8x8x8xf32, #tpu.memory_space<vmem>>, vector<8x8x8xf32>
    tpu.vector_store %arg8[%c0_2, %c0_3, %c0_4], %2 {strides = array<i32>} : memref<8x8x8xf32, #tpu.memory_space<vmem>>, vector<8x8x8xf32>,
    %cst_5 = arith.constant 0.000000e+00 : f32
    %4 = vector.broadcast %cst_5 : f32 to vector<8x32xf32>
    %c0_6 = arith.constant 0 : index
    %c0_7 = arith.constant 0 : index
    %c0_8 = arith.constant 0 : index
    %5 = vector.load %arg8[%c0_6, %c0_7, %c0_8] : memref<8x8x8xf32, #tpu.memory_space<vmem>>, vector<8x1x8xf32>
    %6 = vector.shape_cast %5 : vector<8x1x8xf32> to vector<8x8xf32>
    %c0_9 = arith.constant 0 : index
    %c0_10 = arith.constant 0 : index
    %7 = vector.load %arg2[%c0_9, %c0_10] : memref<64x32xbf16, #tpu.memory_space<vmem>>, vector<8x32xbf16>
    %8 = arith.truncf %6 : vector<8x8xf32> to vector<8x8xbf16>
    %cst_11 = arith.constant dense<0.000000e+00> : vector<8x32xf32>
    %9 = tpu.matmul %8, %7, %cst_11 {dimension_numbers = #tpu.dot_dimension_numbers<[1], [0], [0], [1], [0, 0, 1, 1], [], []>} : vector<8x8xbf16>, vector<8x32xbf16>, vector<8x32xf32> -> vector<8x32xf32>
    %10 = arith.addf %4, %9 : vector<8x32xf32>
    %c0_12 = arith.constant 0 : index
    %c1 = arith.constant 1 : index
    %c0_13 = arith.constant 0 : index
    %11 = vector.load %arg8[%c0_12, %c1, %c0_13] : memref<8x8x8xf32, #tpu.memory_space<vmem>>, vector<8x1x8xf32>
    %12 = vector.shape_cast %11 : vector<8x1x8xf32> to vector<8x8xf32>
    %c8 = arith.constant 8 : index
    %c0_14 = arith.constant 0 : index
    %13 = vector.load %arg2[%c8, %c0_14] : memref<64x32xbf16, #tpu.memory_space<vmem>>, vector<8x32xbf16>
    %14 = arith.truncf %12 : vector<8x8xf32> to vector<8x8xbf16>
    %cst_15 = arith.constant dense<0.000000e+00> : vector<8x32xf32>
    %15 = tpu.matmul %14, %13, %cst_15 {dimension_numbers = #tpu.dot_dimension_numbers<[1], [0], [0], [1], [0, 0, 1, 1], [], []>} : vector<8x8xbf16>, vector<8x32xbf16>, vector<8x32xf32> -> vector<8x32xf32>
    %16 = arith.addf %10, %15 : vector<8x32xf32>
    %c0_16 = arith.constant 0 : index
    %c2 = arith.constant 2 : index
    %c0_17 = arith.constant 0 : index
    %17 = vector.load %arg8[%c0_16, %c2, %c0_17] : memref<8x8x8xf32, #tpu.memory_space<vmem>>, vector<8x1x8xf32>
    %18 = vector.shape_cast %17 : vector<8x1x8xf32> to vector<8x8xf32>
    %c16 = arith.constant 16 : index
    %c0_18 = arith.constant 0 : index
    %19 = vector.load %arg2[%c16, %c0_18] : memref<64x32xbf16, #tpu.memory_space<vmem>>, vector<8x32xbf16>
    %20 = arith.truncf %18 : vector<8x8xf32> to vector<8x8xbf16>
    %cst_19 = arith.constant dense<0.000000e+00> : vector<8x32xf32>
    %21 = tpu.matmul %20, %19, %cst_19 {dimension_numbers = #tpu.dot_dimension_numbers<[1], [0], [0], [1], [0, 0, 1, 1], [], []>} : vector<8x8xbf16>, vector<8x32xbf16>, vector<8x32xf32> -> vector<8x32xf32>
    %22 = arith.addf %16, %21 : vector<8x32xf32>
    %c0_20 = arith.constant 0 : index
    %c3 = arith.constant 3 : index
    %c0_21 = arith.constant 0 : index
    %23 = vector.load %arg8[%c0_20, %c3, %c0_21] : memref<8x8x8xf32, #tpu.memory_space<vmem>>, vector<8x1x8xf32>
    %24 = vector.shape_cast %23 : vector<8x1x8xf32> to vector<8x8xf32>
    %c24 = arith.constant 24 : index
    %c0_22 = arith.constant 0 : index
    %25 = vector.load %arg2[%c24, %c0_22] : memref<64x32xbf16, #tpu.memory_space<vmem>>, vector<8x32xbf16>
    %26 = arith.truncf %24 : vector<8x8xf32> to vector<8x8xbf16>
    %cst_23 = arith.constant dense<0.000000e+00> : vector<8x32xf32>
    %27 = tpu.matmul %26, %25, %cst_23 {dimension_numbers = #tpu.dot_dimension_numbers<[1], [0], [0], [1], [0, 0, 1, 1], [], []>} : vector<8x8xbf16>, vector<8x32xbf16>, vector<8x32xf32> -> vector<8x32xf32>
    %28 = arith.addf %22, %27 : vector<8x32xf32>
    %c0_24 = arith.constant 0 : index
    %c4 = arith.constant 4 : index
    %c0_25 = arith.constant 0 : index
    %29 = vector.load %arg8[%c0_24, %c4, %c0_25] : memref<8x8x8xf32, #tpu.memory_space<vmem>>, vector<8x1x8xf32>
    %30 = vector.shape_cast %29 : vector<8x1x8xf32> to vector<8x8xf32>
    %c32 = arith.constant 32 : index
    %c0_26 = arith.constant 0 : index
    %31 = vector.load %arg2[%c32, %c0_26] : memref<64x32xbf16, #tpu.memory_space<vmem>>, vector<8x32xbf16>
    %32 = arith.truncf %30 : vector<8x8xf32> to vector<8x8xbf16>
    %cst_27 = arith.constant dense<0.000000e+00> : vector<8x32xf32>
    %33 = tpu.matmul %32, %31, %cst_27 {dimension_numbers = #tpu.dot_dimension_numbers<[1], [0], [0], [1], [0, 0, 1, 1], [], []>} : vector<8x8xbf16>, vector<8x32xbf16>, vector<8x32xf32> -> vector<8x32xf32>
    %34 = arith.addf %28, %33 : vector<8x32xf32>
    %c0_28 = arith.constant 0 : index
    %c5 = arith.constant 5 : index
    %c0_29 = arith.constant 0 : index
    %35 = vector.load %arg8[%c0_28, %c5, %c0_29] : memref<8x8x8xf32, #tpu.memory_space<vmem>>, vector<8x1x8xf32>
    %36 = vector.shape_cast %35 : vector<8x1x8xf32> to vector<8x8xf32>
    %c40 = arith.constant 40 : index
    %c0_30 = arith.constant 0 : index
    %37 = vector.load %arg2[%c40, %c0_30] : memref<64x32xbf16, #tpu.memory_space<vmem>>, vector<8x32xbf16>
    %38 = arith.truncf %36 : vector<8x8xf32> to vector<8x8xbf16>
    %cst_31 = arith.constant dense<0.000000e+00> : vector<8x32xf32>
    %39 = tpu.matmul %38, %37, %cst_31 {dimension_numbers = #tpu.dot_dimension_numbers<[1], [0], [0], [1], [0, 0, 1, 1], [], []>} : vector<8x8xbf16>, vector<8x32xbf16>, vector<8x32xf32> -> vector<8x32xf32>
    %40 = arith.addf %34, %39 : vector<8x32xf32>
    %c0_32 = arith.constant 0 : index
    %c6 = arith.constant 6 : index
    %c0_33 = arith.constant 0 : index
    %41 = vector.load %arg8[%c0_32, %c6, %c0_33] : memref<8x8x8xf32, #tpu.memory_space<vmem>>, vector<8x1x8xf32>
    %42 = vector.shape_cast %41 : vector<8x1x8xf32> to vector<8x8xf32>
    %c48 = arith.constant 48 : index
    %c0_34 = arith.constant 0 : index
    %43 = vector.load %arg2[%c48, %c0_34] : memref<64x32xbf16, #tpu.memory_space<vmem>>, vector<8x32xbf16>
    %44 = arith.truncf %42 : vector<8x8xf32> to vector<8x8xbf16>
    %cst_35 = arith.constant dense<0.000000e+00> : vector<8x32xf32>
    %45 = tpu.matmul %44, %43, %cst_35 {dimension_numbers = #tpu.dot_dimension_numbers<[1], [0], [0], [1], [0, 0, 1, 1], [], []>} : vector<8x8xbf16>, vector<8x32xbf16>, vector<8x32xf32> -> vector<8x32xf32>
    %46 = arith.addf %40, %45 : vector<8x32xf32>
    %c0_36 = arith.constant 0 : index
    %c7 = arith.constant 7 : index
    %c0_37 = arith.constant 0 : index
    %47 = vector.load %arg8[%c0_36, %c7, %c0_37] : memref<8x8x8xf32, #tpu.memory_space<vmem>>, vector<8x1x8xf32>
    %48 = vector.shape_cast %47 : vector<8x1x8xf32> to vector<8x8xf32>
    %c56 = arith.constant 56 : index
    %c0_38 = arith.constant 0 : index
    %49 = vector.load %arg2[%c56, %c0_38] : memref<64x32xbf16, #tpu.memory_space<vmem>>, vector<8x32xbf16>
    %50 = arith.truncf %48 : vector<8x8xf32> to vector<8x8xbf16>
    %cst_39 = arith.constant dense<0.000000e+00> : vector<8x32xf32>
    %51 = tpu.matmul %50, %49, %cst_39 {dimension_numbers = #tpu.dot_dimension_numbers<[1], [0], [0], [1], [0, 0, 1, 1], [], []>} : vector<8x8xbf16>, vector<8x32xbf16>, vector<8x32xf32> -> vector<8x32xf32>
    %52 = arith.addf %46, %51 : vector<8x32xf32>
    %c0_40 = arith.constant 0 : index
    %c0_41 = arith.constant 0 : index
    %53 = vector.load %arg3[%c0_40, %c0_41] : memref<1x32xf32, #tpu.memory_space<vmem>>, vector<1x32xf32>
    %54 = vector.broadcast %53 : vector<1x32xf32> to vector<8x32xf32>
    %55 = arith.addf %52, %54 : vector<8x32xf32>
    %cst_42 = arith.constant 0.000000e+00 : f32
    %56 = vector.broadcast %cst_42 : f32 to vector<8x32xf32>
    %57 = arith.maximumf %55, %56 : vector<8x32xf32>
    %c0_43 = arith.constant 0 : index
    %c0_44 = arith.constant 0 : index
    %58 = vector.load %arg4[%c0_43, %c0_44] : memref<32x16xbf16, #tpu.memory_space<vmem>>, vector<32x16xbf16>
    %59 = arith.truncf %57 : vector<8x32xf32> to vector<8x32xbf16>
    %cst_45 = arith.constant dense<0.000000e+00> : vector<8x16xf32>
    %60 = tpu.matmul %59, %58, %cst_45 {dimension_numbers = #tpu.dot_dimension_numbers<[1], [0], [0], [1], [0, 0, 1, 1], [], []>} : vector<8x32xbf16>, vector<32x16xbf16>, vector<8x16xf32> -> vector<8x16xf32>
    %c0_46 = arith.constant 0 : index
    %c0_47 = arith.constant 0 : index
    %61 = vector.load %arg5[%c0_46, %c0_47] : memref<1x16xf32, #tpu.memory_space<vmem>>, vector<1x16xf32>
    %62 = vector.broadcast %61 : vector<1x16xf32> to vector<8x16xf32>
    %63 = arith.addf %60, %62 : vector<8x16xf32>
    %cst_48 = arith.constant 0.000000e+00 : f32
    %64 = vector.broadcast %cst_48 : f32 to vector<8x16xf32>
    %65 = arith.maximumf %63, %64 : vector<8x16xf32>
    %c0_49 = arith.constant 0 : index
    %c0_50 = arith.constant 0 : index
    %66 = vector.load %arg6[%c0_49, %c0_50] : memref<16x128xbf16, #tpu.memory_space<vmem>>, vector<16x128xbf16>
    %67 = arith.truncf %65 : vector<8x16xf32> to vector<8x16xbf16>
    %cst_51 = arith.constant dense<0.000000e+00> : vector<8x128xf32>
    %68 = tpu.matmul %67, %66, %cst_51 {dimension_numbers = #tpu.dot_dimension_numbers<[1], [0], [0], [1], [0, 0, 1, 1], [], []>} : vector<8x16xbf16>, vector<16x128xbf16>, vector<8x128xf32> -> vector<8x128xf32>
    %c0_52 = arith.constant 0 : index
    %c0_53 = arith.constant 0 : index
    %69 = vector.load %arg7[%c0_52, %c0_53] : memref<8x128xf32, #tpu.memory_space<vmem>>, vector<8x128xf32>
    tpu.vector_store %arg7[%c0_52, %c0_53], %68 {strides = array<i32>} : memref<8x128xf32, #tpu.memory_space<vmem>>, vector<8x128xf32>,
    return
  }
  func.func @transform_0(%arg0: i32) -> (i32, i32, i32) {
    %c0_i32 = arith.constant 0 : i32
    %c0_i32_0 = arith.constant 0 : i32
    %c0_i32_1 = arith.constant 0 : i32
    return %arg0, %c0_i32, %c0_i32_0 : i32, i32, i32
  }
  func.func @transform_1(%arg0: i32) -> (i32, i32) {
    %c0_i32 = arith.constant 0 : i32
    %c0_i32_0 = arith.constant 0 : i32
    %c0_i32_1 = arith.constant 0 : i32
    return %c0_i32, %c0_i32_0 : i32, i32
  }
  func.func @transform_2(%arg0: i32) -> (i32, i32) {
    %c0_i32 = arith.constant 0 : i32
    %c0_i32_0 = arith.constant 0 : i32
    %c0_i32_1 = arith.constant 0 : i32
    return %c0_i32, %c0_i32_0 : i32, i32
  }
  func.func @transform_3(%arg0: i32) -> (i32, i32) {
    %c0_i32 = arith.constant 0 : i32
    %c0_i32_0 = arith.constant 0 : i32
    %c0_i32_1 = arith.constant 0 : i32
    return %c0_i32, %c0_i32_0 : i32, i32
  }
  func.func @transform_4(%arg0: i32) -> (i32, i32) {
    %c0_i32 = arith.constant 0 : i32
    %c0_i32_0 = arith.constant 0 : i32
    %c0_i32_1 = arith.constant 0 : i32
    return %c0_i32, %c0_i32_0 : i32, i32
  }
  func.func @transform_5(%arg0: i32) -> (i32, i32) {
    %c0_i32 = arith.constant 0 : i32
    %c0_i32_0 = arith.constant 0 : i32
    %c0_i32_1 = arith.constant 0 : i32
    return %c0_i32, %c0_i32_0 : i32, i32
  }
  func.func @transform_6(%arg0: i32) -> (i32, i32) {
    %c0_i32 = arith.constant 0 : i32
    %c0_i32_0 = arith.constant 0 : i32
    return %arg0, %c0_i32 : i32, i32
  }
}

module attributes {stable_mosaic.version = 11 : i64} {
  func.func @_gnn_kernel(%arg0: i32, %arg1: memref<1x14x10xf32, #tpu.memory_space<vmem>>, %arg2: memref<1x14x14xf32, #tpu.memory_space<vmem>>, %arg3: memref<10x64xbf16, #tpu.memory_space<vmem>>, %arg4: memref<1x64xf32, #tpu.memory_space<vmem>>, %arg5: memref<16x32xbf16, #tpu.memory_space<vmem>>, %arg6: memref<1x32xf32, #tpu.memory_space<vmem>>, %arg7: memref<1x14x8xf32, #tpu.memory_space<vmem>>) attributes {dimension_semantics = [#tpu.dimension_semantics<parallel>], iteration_bounds = array<i64: 8>, scalar_prefetch = 0 : i64, scratch_operands = 0 : i64, tpu.core_type = #tpu.core_type<tc>, window_params = [{transform_indices = @transform_0, window_bounds = array<i64: 1, 14, 10>}, {transform_indices = @transform_1, window_bounds = array<i64: 1, 14, 14>}, {pipeline_mode = #tpu.pipeline_mode<synchronous>, transform_indices = @transform_2, window_bounds = array<i64: 10, 64>}, {pipeline_mode = #tpu.pipeline_mode<synchronous>, transform_indices = @transform_3, window_bounds = array<i64: 1, 64>}, {pipeline_mode = #tpu.pipeline_mode<synchronous>, transform_indices = @transform_4, window_bounds = array<i64: 16, 32>}, {pipeline_mode = #tpu.pipeline_mode<synchronous>, transform_indices = @transform_5, window_bounds = array<i64: 1, 32>}, {transform_indices = @transform_6, window_bounds = array<i64: 1, 14, 8>}]} {
    %c0 = arith.constant 0 : index
    %c0_0 = arith.constant 0 : index
    %c0_1 = arith.constant 0 : index
    %0 = vector.load %arg1[%c0, %c0_0, %c0_1] : memref<1x14x10xf32, #tpu.memory_space<vmem>>, vector<1x14x10xf32>
    %1 = vector.shape_cast %0 : vector<1x14x10xf32> to vector<14x10xf32>
    %c0_2 = arith.constant 0 : index
    %c0_3 = arith.constant 0 : index
    %c0_4 = arith.constant 0 : index
    %2 = vector.load %arg2[%c0_2, %c0_3, %c0_4] : memref<1x14x14xf32, #tpu.memory_space<vmem>>, vector<1x14x14xf32>
    %3 = vector.shape_cast %2 : vector<1x14x14xf32> to vector<14x14xf32>
    %c0_5 = arith.constant 0 : index
    %c0_6 = arith.constant 0 : index
    %4 = vector.load %arg3[%c0_5, %c0_6] : memref<10x64xbf16, #tpu.memory_space<vmem>>, vector<10x64xbf16>
    %5 = arith.truncf %1 : vector<14x10xf32> to vector<14x10xbf16>
    %cst = arith.constant dense<0.000000e+00> : vector<14x64xf32>
    %6 = tpu.matmul %5, %4, %cst {dimension_numbers = #tpu.dot_dimension_numbers<[1], [0], [0], [1], [0, 0, 1, 1], [], []>} : vector<14x10xbf16>, vector<10x64xbf16>, vector<14x64xf32> -> vector<14x64xf32>
    %c0_7 = arith.constant 0 : index
    %c0_8 = arith.constant 0 : index
    %7 = vector.load %arg4[%c0_7, %c0_8] : memref<1x64xf32, #tpu.memory_space<vmem>>, vector<1x64xf32>
    %8 = vector.broadcast %7 : vector<1x64xf32> to vector<14x64xf32>
    %9 = arith.addf %6, %8 : vector<14x64xf32>
    %10 = vector.extract_strided_slice %9 {offsets = [0, 0], sizes = [14, 16], strides = [1, 1]} : vector<14x64xf32> to vector<14x16xf32>
    %11 = vector.extract_strided_slice %9 {offsets = [0, 16], sizes = [14, 16], strides = [1, 1]} : vector<14x64xf32> to vector<14x16xf32>
    %12 = vector.extract_strided_slice %9 {offsets = [0, 32], sizes = [14, 16], strides = [1, 1]} : vector<14x64xf32> to vector<14x16xf32>
    %13 = vector.extract_strided_slice %9 {offsets = [0, 48], sizes = [14, 16], strides = [1, 1]} : vector<14x64xf32> to vector<14x16xf32>
    %14 = arith.truncf %10 : vector<14x16xf32> to vector<14x16xbf16>
    %15 = arith.truncf %11 : vector<14x16xf32> to vector<14x16xbf16>
    %cst_9 = arith.constant dense<0.000000e+00> : vector<14x14xf32>
    %16 = tpu.matmul %14, %15, %cst_9 {dimension_numbers = #tpu.dot_dimension_numbers<[1], [1], [0], [0], [0, 0, 1, 0], [], []>} : vector<14x16xbf16>, vector<14x16xbf16>, vector<14x14xf32> -> vector<14x14xf32>
    %cst_10 = arith.constant 2.500000e-01 : f32
    %17 = vector.broadcast %cst_10 : f32 to vector<14x14xf32>
    %18 = arith.mulf %16, %17 : vector<14x14xf32>
    %19 = arith.addf %18, %3 : vector<14x14xf32>
    %cst_11 = arith.constant dense<0xFF800000> : vector<14xf32>
    %20 = vector.multi_reduction <maximumf>, %19, %cst_11 [1] : vector<14x14xf32> to vector<14xf32>
    %21 = vector.shape_cast %20 : vector<14xf32> to vector<14x1xf32>
    %22 = vector.broadcast %21 : vector<14x1xf32> to vector<14x14xf32>
    %23 = arith.subf %19, %22 : vector<14x14xf32>
    %24 = math.exp %23 : vector<14x14xf32>
    %cst_12 = arith.constant dense<0.000000e+00> : vector<14xf32>
    %25 = vector.multi_reduction <add>, %24, %cst_12 [1] : vector<14x14xf32> to vector<14xf32>
    %26 = vector.shape_cast %25 : vector<14xf32> to vector<14x1xf32>
    %27 = tpu.reciprocal %26 {approx = true} : vector<14x1xf32> -> vector<14x1xf32>
    %cst_13 = arith.constant -5.000000e+29 : f32
    %28 = vector.broadcast %cst_13 : f32 to vector<14x1xf32>
    %29 = arith.cmpf ogt, %21, %28 : vector<14x1xf32>
    %cst_14 = arith.constant 0.000000e+00 : f32
    %30 = vector.broadcast %cst_14 : f32 to vector<14x1xf32>
    %31 = arith.select %29, %27, %30 : vector<14x1xi1>, vector<14x1xf32>
    %32 = vector.broadcast %31 : vector<14x1xf32> to vector<14x14xf32>
    %33 = arith.mulf %24, %32 : vector<14x14xf32>
    %34 = arith.truncf %33 : vector<14x14xf32> to vector<14x14xbf16>
    %35 = arith.truncf %12 : vector<14x16xf32> to vector<14x16xbf16>
    %cst_15 = arith.constant dense<0.000000e+00> : vector<14x16xf32>
    %36 = tpu.matmul %34, %35, %cst_15 {dimension_numbers = #tpu.dot_dimension_numbers<[1], [0], [0], [1], [0, 0, 1, 1], [], []>} : vector<14x14xbf16>, vector<14x16xbf16>, vector<14x16xf32> -> vector<14x16xf32>
    %37 = arith.addf %36, %13 : vector<14x16xf32>
    %cst_16 = arith.constant dense<0.000000e+00> : vector<16xf32>
    %38 = vector.multi_reduction <add>, %37, %cst_16 [0] : vector<14x16xf32> to vector<16xf32>
    %39 = vector.shape_cast %38 : vector<16xf32> to vector<1x16xf32>
    %cst_17 = arith.constant 1.400000e+01 : f32
    %40 = vector.broadcast %cst_17 : f32 to vector<1x16xf32>
    %41 = arith.divf %39, %40 : vector<1x16xf32>
    %42 = vector.broadcast %41 : vector<1x16xf32> to vector<14x16xf32>
    %43 = arith.subf %37, %42 : vector<14x16xf32>
    %44 = arith.mulf %43, %43 : vector<14x16xf32>
    %cst_18 = arith.constant dense<0.000000e+00> : vector<16xf32>
    %45 = vector.multi_reduction <add>, %44, %cst_18 [0] : vector<14x16xf32> to vector<16xf32>
    %46 = vector.shape_cast %45 : vector<16xf32> to vector<1x16xf32>
    %cst_19 = arith.constant 1.400000e+01 : f32
    %47 = vector.broadcast %cst_19 : f32 to vector<1x16xf32>
    %48 = arith.divf %46, %47 : vector<1x16xf32>
    %49 = vector.broadcast %41 : vector<1x16xf32> to vector<14x16xf32>
    %50 = arith.subf %37, %49 : vector<14x16xf32>
    %cst_20 = arith.constant 9.99999974E-6 : f32
    %51 = vector.broadcast %cst_20 : f32 to vector<1x16xf32>
    %52 = arith.addf %48, %51 : vector<1x16xf32>
    %53 = math.rsqrt %52 : vector<1x16xf32>
    %54 = vector.broadcast %53 : vector<1x16xf32> to vector<14x16xf32>
    %55 = arith.mulf %50, %54 : vector<14x16xf32>
    %c0_21 = arith.constant 0 : index
    %c0_22 = arith.constant 0 : index
    %56 = vector.load %arg5[%c0_21, %c0_22] : memref<16x32xbf16, #tpu.memory_space<vmem>>, vector<16x32xbf16>
    %57 = arith.truncf %55 : vector<14x16xf32> to vector<14x16xbf16>
    %cst_23 = arith.constant dense<0.000000e+00> : vector<14x32xf32>
    %58 = tpu.matmul %57, %56, %cst_23 {dimension_numbers = #tpu.dot_dimension_numbers<[1], [0], [0], [1], [0, 0, 1, 1], [], []>} : vector<14x16xbf16>, vector<16x32xbf16>, vector<14x32xf32> -> vector<14x32xf32>
    %c0_24 = arith.constant 0 : index
    %c0_25 = arith.constant 0 : index
    %59 = vector.load %arg6[%c0_24, %c0_25] : memref<1x32xf32, #tpu.memory_space<vmem>>, vector<1x32xf32>
    %60 = vector.broadcast %59 : vector<1x32xf32> to vector<14x32xf32>
    %61 = arith.addf %58, %60 : vector<14x32xf32>
    %62 = vector.extract_strided_slice %61 {offsets = [0, 0], sizes = [14, 8], strides = [1, 1]} : vector<14x32xf32> to vector<14x8xf32>
    %63 = vector.extract_strided_slice %61 {offsets = [0, 8], sizes = [14, 8], strides = [1, 1]} : vector<14x32xf32> to vector<14x8xf32>
    %64 = vector.extract_strided_slice %61 {offsets = [0, 16], sizes = [14, 8], strides = [1, 1]} : vector<14x32xf32> to vector<14x8xf32>
    %65 = vector.extract_strided_slice %61 {offsets = [0, 24], sizes = [14, 8], strides = [1, 1]} : vector<14x32xf32> to vector<14x8xf32>
    %66 = arith.truncf %62 : vector<14x8xf32> to vector<14x8xbf16>
    %67 = arith.truncf %63 : vector<14x8xf32> to vector<14x8xbf16>
    %cst_26 = arith.constant dense<0.000000e+00> : vector<14x14xf32>
    %68 = tpu.matmul %66, %67, %cst_26 {dimension_numbers = #tpu.dot_dimension_numbers<[1], [1], [0], [0], [0, 0, 1, 0], [], []>} : vector<14x8xbf16>, vector<14x8xbf16>, vector<14x14xf32> -> vector<14x14xf32>
    %cst_27 = arith.constant 0.353553385 : f32
    %69 = vector.broadcast %cst_27 : f32 to vector<14x14xf32>
    %70 = arith.mulf %68, %69 : vector<14x14xf32>
    %71 = arith.addf %70, %3 : vector<14x14xf32>
    %cst_28 = arith.constant dense<0xFF800000> : vector<14xf32>
    %72 = vector.multi_reduction <maximumf>, %71, %cst_28 [1] : vector<14x14xf32> to vector<14xf32>
    %73 = vector.shape_cast %72 : vector<14xf32> to vector<14x1xf32>
    %74 = vector.broadcast %73 : vector<14x1xf32> to vector<14x14xf32>
    %75 = arith.subf %71, %74 : vector<14x14xf32>
    %76 = math.exp %75 : vector<14x14xf32>
    %cst_29 = arith.constant dense<0.000000e+00> : vector<14xf32>
    %77 = vector.multi_reduction <add>, %76, %cst_29 [1] : vector<14x14xf32> to vector<14xf32>
    %78 = vector.shape_cast %77 : vector<14xf32> to vector<14x1xf32>
    %79 = tpu.reciprocal %78 {approx = true} : vector<14x1xf32> -> vector<14x1xf32>
    %cst_30 = arith.constant -5.000000e+29 : f32
    %80 = vector.broadcast %cst_30 : f32 to vector<14x1xf32>
    %81 = arith.cmpf ogt, %73, %80 : vector<14x1xf32>
    %cst_31 = arith.constant 0.000000e+00 : f32
    %82 = vector.broadcast %cst_31 : f32 to vector<14x1xf32>
    %83 = arith.select %81, %79, %82 : vector<14x1xi1>, vector<14x1xf32>
    %84 = vector.broadcast %83 : vector<14x1xf32> to vector<14x14xf32>
    %85 = arith.mulf %76, %84 : vector<14x14xf32>
    %86 = arith.truncf %85 : vector<14x14xf32> to vector<14x14xbf16>
    %87 = arith.truncf %64 : vector<14x8xf32> to vector<14x8xbf16>
    %cst_32 = arith.constant dense<0.000000e+00> : vector<14x8xf32>
    %88 = tpu.matmul %86, %87, %cst_32 {dimension_numbers = #tpu.dot_dimension_numbers<[1], [0], [0], [1], [0, 0, 1, 1], [], []>} : vector<14x14xbf16>, vector<14x8xbf16>, vector<14x8xf32> -> vector<14x8xf32>
    %89 = arith.addf %88, %65 : vector<14x8xf32>
    %cst_33 = arith.constant dense<0.000000e+00> : vector<8xf32>
    %90 = vector.multi_reduction <add>, %89, %cst_33 [0] : vector<14x8xf32> to vector<8xf32>
    %91 = vector.shape_cast %90 : vector<8xf32> to vector<1x8xf32>
    %cst_34 = arith.constant 1.400000e+01 : f32
    %92 = vector.broadcast %cst_34 : f32 to vector<1x8xf32>
    %93 = arith.divf %91, %92 : vector<1x8xf32>
    %94 = vector.broadcast %93 : vector<1x8xf32> to vector<14x8xf32>
    %95 = arith.subf %89, %94 : vector<14x8xf32>
    %96 = arith.mulf %95, %95 : vector<14x8xf32>
    %cst_35 = arith.constant dense<0.000000e+00> : vector<8xf32>
    %97 = vector.multi_reduction <add>, %96, %cst_35 [0] : vector<14x8xf32> to vector<8xf32>
    %98 = vector.shape_cast %97 : vector<8xf32> to vector<1x8xf32>
    %cst_36 = arith.constant 1.400000e+01 : f32
    %99 = vector.broadcast %cst_36 : f32 to vector<1x8xf32>
    %100 = arith.divf %98, %99 : vector<1x8xf32>
    %101 = vector.broadcast %93 : vector<1x8xf32> to vector<14x8xf32>
    %102 = arith.subf %89, %101 : vector<14x8xf32>
    %cst_37 = arith.constant 9.99999974E-6 : f32
    %103 = vector.broadcast %cst_37 : f32 to vector<1x8xf32>
    %104 = arith.addf %100, %103 : vector<1x8xf32>
    %105 = math.rsqrt %104 : vector<1x8xf32>
    %106 = vector.broadcast %105 : vector<1x8xf32> to vector<14x8xf32>
    %107 = arith.mulf %102, %106 : vector<14x8xf32>
    %cst_38 = arith.constant 0.000000e+00 : f32
    %108 = vector.broadcast %cst_38 : f32 to vector<14x8xf32>
    %109 = arith.maximumf %107, %108 : vector<14x8xf32>
    %c0_39 = arith.constant 0 : index
    %c0_40 = arith.constant 0 : index
    %c0_41 = arith.constant 0 : index
    %110 = vector.load %arg7[%c0_39, %c0_40, %c0_41] : memref<1x14x8xf32, #tpu.memory_space<vmem>>, vector<1x14x8xf32>
    %111 = vector.shape_cast %110 : vector<1x14x8xf32> to vector<14x8xf32>
    %112 = vector.shape_cast %109 : vector<14x8xf32> to vector<1x14x8xf32>
    tpu.vector_store %arg7[%c0_39, %c0_40, %c0_41], %112 {strides = array<i32>} : memref<1x14x8xf32, #tpu.memory_space<vmem>>, vector<1x14x8xf32>,
    return
  }
  func.func @transform_0(%arg0: i32) -> (i32, i32, i32) {
    %c0_i32 = arith.constant 0 : i32
    %c0_i32_0 = arith.constant 0 : i32
    %c0_i32_1 = arith.constant 0 : i32
    return %arg0, %c0_i32, %c0_i32_0 : i32, i32, i32
  }
  func.func @transform_1(%arg0: i32) -> (i32, i32, i32) {
    %c0_i32 = arith.constant 0 : i32
    %c0_i32_0 = arith.constant 0 : i32
    %c0_i32_1 = arith.constant 0 : i32
    return %arg0, %c0_i32, %c0_i32_0 : i32, i32, i32
  }
  func.func @transform_2(%arg0: i32) -> (i32, i32) {
    %c0_i32 = arith.constant 0 : i32
    %c0_i32_0 = arith.constant 0 : i32
    %c0_i32_1 = arith.constant 0 : i32
    return %c0_i32, %c0_i32_0 : i32, i32
  }
  func.func @transform_3(%arg0: i32) -> (i32, i32) {
    %c0_i32 = arith.constant 0 : i32
    %c0_i32_0 = arith.constant 0 : i32
    %c0_i32_1 = arith.constant 0 : i32
    return %c0_i32, %c0_i32_0 : i32, i32
  }
  func.func @transform_4(%arg0: i32) -> (i32, i32) {
    %c0_i32 = arith.constant 0 : i32
    %c0_i32_0 = arith.constant 0 : i32
    %c0_i32_1 = arith.constant 0 : i32
    return %c0_i32, %c0_i32_0 : i32, i32
  }
  func.func @transform_5(%arg0: i32) -> (i32, i32) {
    %c0_i32 = arith.constant 0 : i32
    %c0_i32_0 = arith.constant 0 : i32
    %c0_i32_1 = arith.constant 0 : i32
    return %c0_i32, %c0_i32_0 : i32, i32
  }
  func.func @transform_6(%arg0: i32) -> (i32, i32, i32) {
    %c0_i32 = arith.constant 0 : i32
    %c0_i32_0 = arith.constant 0 : i32
    %c0_i32_1 = arith.constant 0 : i32
    return %arg0, %c0_i32, %c0_i32_0 : i32, i32, i32
  }
}

</mosaic_0001>

<llo_original>
// kernel: gecnvnet_forward.2
$region0: #{gecnvnet_forward.2}
  #allocation0 [shape = 'u32[]', space=smem, size = 0x4, offset = 0x4, fixed_abs, tag = 'smem constant byte address 0x4 - core index']
  #allocation1 [shape = 'u32[144,128]{1,0:T(1,128)}', space=vmem, size = 0x12000, scoped, tag = 'internal scratch']
  %s0 = inlined_call_operand.vmem [shape: f32[8,14,10], index: 0, kind: input, shape index: {}]
  %s1 = inlined_call_operand.vmem [shape: f32[8,14,14], index: 1, kind: input, shape index: {}]
  %s2 = inlined_call_operand.vmem [shape: bf16[10,64], index: 2, kind: input, shape index: {}]
  %s3 = inlined_call_operand.vmem [shape: f32[1,64], index: 3, kind: input, shape index: {}]
  %s4 = inlined_call_operand.vmem [shape: bf16[16,32], index: 4, kind: input, shape index: {}]
  %s5 = inlined_call_operand.vmem [shape: f32[1,32], index: 5, kind: input, shape index: {}]
  %s6 = inlined_call_operand.vmem [shape: f32[8,14,8], index: 6, kind: output, shape index: {}]
  %s7 = sld [smem:[#allocation0]]
  $region57: #{gecnvnet_forward.2} parent=0
    _
  %s9 = ssub.s32 1, %s7
  %s10 = scalar_select 0, %s9, %s7
  loop: start=0, step=1, limit=10
  $region2: #{gecnvnet_forward.2} parent=0 // loop_pre_header
    _
  $region3: #{gecnvnet_forward.2} parent=0 // loop_header
    %s12 = sphi 0, %s16
    %p13 = scmp.ge.s32.totalorder %s12, 10
    %s22 = sphi 0, %s24
    %s25 = sphi 0, %s22
    %s26 = sphi 0, %s25
    %s42 = sphi 0, %s26
    %s48 = sphi 0, %s50
    %s51 = sphi 0, %s48
    %s52 = sphi 0, %s51
    %s68 = sphi 0, %s52
    %s72 = sphi 0, %s72
    %s74 = sphi 0, %s72
    %s75 = sphi 0, %s74
    %s89 = sphi 0, %s75
    %s93 = sphi 0, %s93
    %s95 = sphi 0, %s93
    %s96 = sphi 0, %s95
    %s110 = sphi 0, %s96
    %s114 = sphi 0, %s114
    %s116 = sphi 0, %s114
    %s117 = sphi 0, %s116
    %s131 = sphi 0, %s117
    %s135 = sphi 0, %s135
    %s137 = sphi 0, %s135
    %s138 = sphi 0, %s137
    %s152 = sphi 0, %s138
    %s158 = sphi 0, %s160
    %s161 = sphi 0, %s158
    %s162 = sphi 0, %s161
    %s178 = sphi 0, %s162
  $region4: #{gecnvnet_forward.2} parent=0 // loop_header_branch
    %15 = sbr.rel (%p13) target = $region8
  $region5: #{gecnvnet_forward.2} parent=0 // loop_body
    %s17 = ssub.s32 %s12, 1
    %s18 = ssub.s32 %s12, 2
    %s19 = sadd.s32 %s12, 1
    %s20 = ssub.s32 %s12, %s19
    %p21 = scmp.eq.s32.totalorder %s20, 0
    %s23 = sadd.s32 %s22, 1
    %s24 = scalar_select %p21, %s22, %s23
    %p27 = pneg %p21
    %p28 = scmp.eq.s32.totalorder %s12, 7
    %p29 = por %p27, %p28
    %p30 = scmp.ne.s32.totalorder %s22, %s25
    %p31 = scmp.eq.s32.totalorder %s12, 0
    %p32 = por %p30, %p31
    %p33 = scmp.ne.s32.totalorder %s22, %s25
    %p34 = scmp.eq.s32.totalorder %s17, 7
    %p35 = por %p33, %p34
    %p36 = scmp.ne.s32.totalorder %s25, %s26
    %p37 = scmp.eq.s32.totalorder %s17, 0
    %p38 = por %p36, %p37
    %p39 = scmp.ne.s32.totalorder %s25, %s26
    %p40 = scmp.eq.s32.totalorder %s18, 7
    %p41 = por %p39, %p40
    %p43 = scmp.ne.s32.totalorder %s26, %s42
    %p44 = scmp.eq.s32.totalorder %s18, 0
    %p45 = por %p43, %p44
    %s46 = ssub.s32 %s12, %s19
    %p47 = scmp.eq.s32.totalorder %s46, 0
    %s49 = sadd.s32 %s48, 1
    %s50 = scalar_select %p47, %s48, %s49
    %p53 = pneg %p47
    %p54 = scmp.eq.s32.totalorder %s12, 7
    %p55 = por %p53, %p54
    %p56 = scmp.ne.s32.totalorder %s48, %s51
    %p57 = scmp.eq.s32.totalorder %s12, 0
    %p58 = por %p56, %p57
    %p59 = scmp.ne.s32.totalorder %s48, %s51
    %p60 = scmp.eq.s32.totalorder %s17, 7
    %p61 = por %p59, %p60
    %p62 = scmp.ne.s32.totalorder %s51, %s52
    %p63 = scmp.eq.s32.totalorder %s17, 0
    %p64 = por %p62, %p63
    %p65 = scmp.ne.s32.totalorder %s51, %s52
    %p66 = scmp.eq.s32.totalorder %s18, 7
    %p67 = por %p65, %p66
    %p69 = scmp.ne.s32.totalorder %s52, %s68
    %p70 = scmp.eq.s32.totalorder %s18, 0
    %p71 = por %p69, %p70
    %s73 = sadd.s32 %s72, 1
    %p76 = scmp.eq.s32.totalorder %s12, 7
    %p77 = scmp.ne.s32.totalorder %s72, %s74
    %p78 = scmp.eq.s32.totalorder %s12, 0
    %p79 = por %p77, %p78
    %p80 = scmp.ne.s32.totalorder %s72, %s74
    %p81 = scmp.eq.s32.totalorder %s17, 7
    %p82 = por %p80, %p81
    %p83 = scmp.ne.s32.totalorder %s74, %s75
    %p84 = scmp.eq.s32.totalorder %s17, 0
    %p85 = por %p83, %p84
    %p86 = scmp.ne.s32.totalorder %s74, %s75
    %p87 = scmp.eq.s32.totalorder %s18, 7
    %p88 = por %p86, %p87
    %p90 = scmp.ne.s32.totalorder %s75, %s89
    %p91 = scmp.eq.s32.totalorder %s18, 0
    %p92 = por %p90, %p91
    %s94 = sadd.s32 %s93, 1
    %p97 = scmp.eq.s32.totalorder %s12, 7
    %p98 = scmp.ne.s32.totalorder %s93, %s95
    %p99 = scmp.eq.s32.totalorder %s12, 0
    %p100 = por %p98, %p99
    %p101 = scmp.ne.s32.totalorder %s93, %s95
    %p102 = scmp.eq.s32.totalorder %s17, 7
    %p103 = por %p101, %p102
    %p104 = scmp.ne.s32.totalorder %s95, %s96
    %p105 = scmp.eq.s32.totalorder %s17, 0
    %p106 = por %p104, %p105
    %p107 = scmp.ne.s32.totalorder %s95, %s96
    %p108 = scmp.eq.s32.totalorder %s18, 7
    %p109 = por %p107, %p108
    %p111 = scmp.ne.s32.totalorder %s96, %s110
    %p112 = scmp.eq.s32.totalorder %s18, 0
    %p113 = por %p111, %p112
    %s115 = sadd.s32 %s114, 1
    %p118 = scmp.eq.s32.totalorder %s12, 7
    %p119 = scmp.ne.s32.totalorder %s114, %s116
    %p120 = scmp.eq.s32.totalorder %s12, 0
    %p121 = por %p119, %p120
    %p122 = scmp.ne.s32.totalorder %s114, %s116
    %p123 = scmp.eq.s32.totalorder %s17, 7
    %p124 = por %p122, %p123
    %p125 = scmp.ne.s32.totalorder %s116, %s117
    %p126 = scmp.eq.s32.totalorder %s17, 0
    %p127 = por %p125, %p126
    %p128 = scmp.ne.s32.totalorder %s116, %s117
    %p129 = scmp.eq.s32.totalorder %s18, 7
    %p130 = por %p128, %p129
    %p132 = scmp.ne.s32.totalorder %s117, %s131
    %p133 = scmp.eq.s32.totalorder %s18, 0
    %p134 = por %p132, %p133
    %s136 = sadd.s32 %s135, 1
    %p139 = scmp.eq.s32.totalorder %s12, 7
    %p140 = scmp.ne.s32.totalorder %s135, %s137
    %p141 = scmp.eq.s32.totalorder %s12, 0
    %p142 = por %p140, %p141
    %p143 = scmp.ne.s32.totalorder %s135, %s137
    %p144 = scmp.eq.s32.totalorder %s17, 7
    %p145 = por %p143, %p144
    %p146 = scmp.ne.s32.totalorder %s137, %s138
    %p147 = scmp.eq.s32.totalorder %s17, 0
    %p148 = por %p146, %p147
    %p149 = scmp.ne.s32.totalorder %s137, %s138
    %p150 = scmp.eq.s32.totalorder %s18, 7
    %p151 = por %p149, %p150
    %p153 = scmp.ne.s32.totalorder %s138, %s152
    %p154 = scmp.eq.s32.totalorder %s18, 0
    %p155 = por %p153, %p154
    %s156 = ssub.s32 %s12, %s19
    %p157 = scmp.eq.s32.totalorder %s156, 0
    %s159 = sadd.s32 %s158, 1
    %s160 = scalar_select %p157, %s158, %s159
    %p163 = pneg %p157
    %p164 = scmp.eq.s32.totalorder %s12, 7
    %p165 = por %p163, %p164
    %p166 = scmp.ne.s32.totalorder %s158, %s161
    %p167 = scmp.eq.s32.totalorder %s12, 0
    %p168 = por %p166, %p167
    %p169 = scmp.ne.s32.totalorder %s158, %s161
    %p170 = scmp.eq.s32.totalorder %s17, 7
    %p171 = por %p169, %p170
    %p172 = scmp.ne.s32.totalorder %s161, %s162
    %p173 = scmp.eq.s32.totalorder %s17, 0
    %p174 = por %p172, %p173
    %p175 = scmp.ne.s32.totalorder %s161, %s162
    %p176 = scmp.eq.s32.totalorder %s18, 7
    %p177 = por %p175, %p176
    %p179 = scmp.ne.s32.totalorder %s162, %s178
    %p180 = scmp.eq.s32.totalorder %s18, 0
    %p181 = por %p179, %p180
    %p182 = scmp.le.s32.totalorder 1, %s12
    %p183 = scmp.lt.s32.totalorder %s12, 9
    %p184 = pnand %p182, %p183
    %p185 = pneg %p184
    // Predicated region
    $region9: #{gecnvnet_forward.2} parent=5 // pred_check
      _
    $region10: #{gecnvnet_forward.2} parent=5 // pred_check_branch
      %187 = sbr.rel (%p184) target = $region12
    $region11: #{gecnvnet_forward.2} parent=5 // pred_region
      %s188 = ssub.s32 %s12, 1
      // Predicated region
      $region13: #{gecnvnet_forward.2} parent=11 // pred_check
        %p189 = pneg %p85
      $region14: #{gecnvnet_forward.2} parent=11 // pred_check_branch
        %191 = sbr.rel (%p189) target = $region16
      $region15: #{gecnvnet_forward.2} parent=11 // pred_region
        _
      $region16: #{gecnvnet_forward.2} parent=11 // pred_fallthru
        _
      // Predicated region
      $region17: #{gecnvnet_forward.2} parent=11 // pred_check
        %p192 = pneg %p106
      $region18: #{gecnvnet_forward.2} parent=11 // pred_check_branch
        %194 = sbr.rel (%p192) target = $region20
      $region19: #{gecnvnet_forward.2} parent=11 // pred_region
        _
      $region20: #{gecnvnet_forward.2} parent=11 // pred_fallthru
        _
      // Predicated region
      $region21: #{gecnvnet_forward.2} parent=11 // pred_check
        %p195 = pneg %p127
      $region22: #{gecnvnet_forward.2} parent=11 // pred_check_branch
        %197 = sbr.rel (%p195) target = $region24
      $region23: #{gecnvnet_forward.2} parent=11 // pred_region
        _
      $region24: #{gecnvnet_forward.2} parent=11 // pred_fallthru
        _
      // Predicated region
      $region25: #{gecnvnet_forward.2} parent=11 // pred_check
        %p198 = pneg %p148
      $region26: #{gecnvnet_forward.2} parent=11 // pred_check_branch
        %200 = sbr.rel (%p198) target = $region28
      $region27: #{gecnvnet_forward.2} parent=11 // pred_region
        _
      $region28: #{gecnvnet_forward.2} parent=11 // pred_fallthru
        _
    $region12: #{gecnvnet_forward.2} parent=5 // pred_fallthru
      _
    %p201 = scmp.lt.s32.totalorder %s12, 8
    // Predicated region
    $region29: #{gecnvnet_forward.2} parent=5 // pred_check
      %p202 = pneg %p201
    $region30: #{gecnvnet_forward.2} parent=5 // pred_check_branch
      %204 = sbr.rel (%p202) target = $region32
    $region31: #{gecnvnet_forward.2} parent=5 // pred_region
      // Predicated region
      $region33: #{gecnvnet_forward.2} parent=31 // pred_check
        %p205 = pneg %p32
      $region34: #{gecnvnet_forward.2} parent=31 // pred_check_branch
        %207 = sbr.rel (%p205) target = $region36
      $region35: #{gecnvnet_forward.2} parent=31 // pred_region
        %p208 = scmp.lt.s32.totalorder %s12, 7
        %s209 = scalar_select %p208, %s12, 7
        %s210 = smul.addr %s209, 2
        %s211 = smul.addr %s210, 8
        %s212 = scalar_lea.vmem %s0, %s211
      $region36: #{gecnvnet_forward.2} parent=31 // pred_fallthru
        _
      // Predicated region
      $region37: #{gecnvnet_forward.2} parent=31 // pred_check
        %p213 = pneg %p58
      $region38: #{gecnvnet_forward.2} parent=31 // pred_check_branch
        %215 = sbr.rel (%p213) target = $region40
      $region39: #{gecnvnet_forward.2} parent=31 // pred_region
        %p216 = scmp.lt.s32.totalorder %s12, 7
        %s217 = scalar_select %p216, %s12, 7
        %s218 = smul.addr %s217, 2
        %s219 = smul.addr %s218, 8
        %s220 = scalar_lea.vmem %s1, %s219
      $region40: #{gecnvnet_forward.2} parent=31 // pred_fallthru
        _
    $region32: #{gecnvnet_forward.2} parent=5 // pred_fallthru
      _
    %p221 = scmp.le.s32.totalorder 1, %s12
    %p222 = scmp.lt.s32.totalorder %s12, 9
    %p223 = pnand %p221, %p222
    %p224 = pneg %p223
    // Predicated region
    $region41: #{gecnvnet_forward.2} parent=5 // pred_check
      _
    $region42: #{gecnvnet_forward.2} parent=5 // pred_check_branch
      %226 = sbr.rel (%p223) target = $region44
    $region43: #{gecnvnet_forward.2} parent=5 // pred_region
      %s227 = ssub.s32 %s12, 1
      %p228 = scmp.lt.s32.totalorder %s17, 7
      %s229 = scalar_select %p228, %s17, 7
      %s230 = smul.addr %s229, 2
      %s231 = smul.addr %s230, 8
      %s232 = scalar_lea.vmem %s0, %s231
      %p233 = pneg %p38
      %p234 = pneg %p35
      %p235 = scmp.lt.s32.totalorder %s17, 7
      %s236 = scalar_select %p235, %s17, 7
      %s237 = smul.addr %s236, 2
      %s238 = smul.addr %s237, 8
      %s239 = scalar_lea.vmem %s1, %s238
      %p240 = pneg %p64
      %p241 = pneg %p61
      %p242 = pneg %p85
      %p243 = pneg %p82
      %p244 = pneg %p106
      %p245 = pneg %p103
      %p246 = pneg %p127
      %p247 = pneg %p124
      %p248 = pneg %p148
      %p249 = pneg %p145
      %p250 = pneg %p174
      %p251 = pneg %p171
      %p252 = scmp.lt.s32.totalorder %s17, 7
      %s253 = scalar_select %p252, %s17, 7
      %s254 = smul.addr %s253, 2
      %s255 = smul.addr %s254, 8
      %s256 = scalar_lea.vmem %s6, %s255
      %p257 = scmp.lt.s32.totalorder %s17, 7
      %s258 = scalar_select %p257, %s17, 7
      %s259 = smul.addr %s258, 2
      %s260 = smul.addr %s259, 8
      %s261 = scalar_lea.vmem %s0, %s260
      %p262 = scmp.lt.s32.totalorder %s17, 7
      %s263 = scalar_select %p262, %s17, 7
      %s264 = smul.addr %s263, 2
      %s265 = smul.addr %s264, 8
      %s266 = scalar_lea.vmem %s1, %s265
      %p267 = scmp.lt.s32.totalorder %s17, 7
      %s268 = scalar_select %p267, %s17, 7
      %s269 = smul.addr %s268, 2
      %s270 = smul.addr %s269, 8
      %s271 = scalar_lea.vmem %s6, %s270
      %v273 = vld [vmem:[%s261] sm:$0xff]
      %v274 = vld [vmem:[%s261 + $0x8] sm:$0x3f]
      %v275 = vld [vmem:[%s266] sm:$0xff]
      %v276 = vld [vmem:[%s266 + $0x8] sm:$0x3f]
      %v277 = vld [vmem:[%s2] sm:$0xf]
      %v278 = vld [vmem:[%s2 + $0x4] sm:$0x1]
      %v279 = vpack.c.bf16 %v274, %v273
      %v280 = vld [vmem:[%s3] sm:$0x1]
      %v282 = vlaneseq
      %v283 = vshrl.u32 %v282, 7
      %v284 = vsub.s32 0, %v283
      %v285 = vrot.slane %v280, %v284
      %v289 = vunpack.c.l.b16 %v277
      %v290 = vunpack.c.l.b16 %v278
      %v291 = vpack.c.b16 %v290, %v289
      %vm292 = vcmask 80896
      %v294 = vsel %vm292, %v279, 0
      %vm296 = vcmask 1044480
      %v298 = vsel %vm296, %v291, 0
      %300 = vmatprep.subr.bf16.mxu0 0
      %301 = vmatpush1.bf16.msra.mxu0 %v298
      %302 = vmatprep.subr.bf16.mxu0 0
      %303 = vmatpush1.bf16.msra.mxu0 0
      %304 = vmatprep.subr.bf16.mxu0 0
      %305 = vmatpush1.bf16.msra.mxu0 0
      %306 = vmatprep.subr.bf16.mxu0 0
      %307 = vmatpush1.bf16.msra.mxu0 0
      %308 = vmatprep.subr.bf16.mxu0 0
      %309 = vmatpush1.bf16.msra.mxu0 0
      %310 = vmatprep.subr.bf16.mxu0 0
      %311 = vmatpush1.bf16.msra.mxu0 0
      %312 = vmatprep.subr.bf16.mxu0 0
      %313 = vmatpush1.bf16.msra.mxu0 0
      %314 = vmatprep.subr.bf16.mxu0 0
      %315 = vmatpush1.bf16.msra.mxu0 0
      %316 = vmatprep.subr.bf16.mxu0 0
      %317 = vmatpush1.bf16.msra.mxu0 0
      %318 = vmatprep.subr.bf16.mxu0 0
      %319 = vmatpush1.bf16.msra.mxu0 0
      %320 = vmatprep.subr.bf16.mxu0 0
      %321 = vmatpush1.bf16.msra.mxu0 0
      %322 = vmatprep.subr.bf16.mxu0 0
      %323 = vmatpush1.bf16.msra.mxu0 0
      %324 = vmatprep.subr.bf16.mxu0 0
      %325 = vmatpush1.bf16.msra.mxu0 0
      %326 = vmatprep.subr.bf16.mxu0 0
      %327 = vmatpush1.bf16.msra.mxu0 0
      %328 = vmatprep.subr.bf16.mxu0 0
      %329 = vmatpush1.bf16.msra.mxu0 0
      %330 = vmatprep.subr.bf16.mxu0 0
      %331 = vmatpush1.bf16.msra.mxu0 0
      %332 = vmatprep.mubr.bf16.mxu0 0
      %333 = vmatmul.mubr.bf16.gmra.mrb[0].mxu0 %v294
      %v334 = vpop.f32.mrb[0].mxu0
      %v335 = vadd.f32 %v285, %v334
      %v336 = vpop.f32.mrb[0].mxu0
      %v337 = vpop.f32.mrb[0].mxu0
      %v338 = vadd.f32 %v285, %v337
      %v339 = vpop.f32.mrb[0].mxu0
      %340 = vdwg.mxu0
      %v341 = vpack.c.bf16 %v338, %v335
      %343 = vrot.lane.b32.xlu0 %v341, 112
      %v344 = vpop.permute.xlu0 %343
      %vm345 = vcmask 130048
      %v347 = vsel %vm345, %v341, 0
      %v350 = vsel %vm345, %v344, 0
      %352 = vmatprep.subr.bf16.mxu0 0
      %353 = vmatpush1.bf16.xpose.msra.mxu0 %v350
      %354 = vmatprep.subr.bf16.mxu0 0
      %355 = vmatpush1.bf16.xpose.msra.mxu0 0
      %356 = vmatprep.subr.bf16.mxu0 0
      %357 = vmatpush1.bf16.xpose.msra.mxu0 0
      %358 = vmatprep.subr.bf16.mxu0 0
      %359 = vmatpush1.bf16.xpose.msra.mxu0 0
      %360 = vmatprep.subr.bf16.mxu0 0
      %361 = vmatpush1.bf16.xpose.msra.mxu0 0
      %362 = vmatprep.subr.bf16.mxu0 0
      %363 = vmatpush1.bf16.xpose.msra.mxu0 0
      %364 = vmatprep.subr.bf16.mxu0 0
      %365 = vmatpush1.bf16.xpose.msra.mxu0 0
      %366 = vmatprep.subr.bf16.mxu0 0
      %367 = vmatpush1.bf16.xpose.msra.mxu0 0
      %368 = vmatprep.subr.bf16.mxu0 0
      %369 = vmatpush1.bf16.xpose.msra.mxu0 0
      %370 = vmatprep.subr.bf16.mxu0 0
      %371 = vmatpush1.bf16.xpose.msra.mxu0 0
      %372 = vmatprep.subr.bf16.mxu0 0
      %373 = vmatpush1.bf16.xpose.msra.mxu0 0
      %374 = vmatprep.subr.bf16.mxu0 0
      %375 = vmatpush1.bf16.xpose.msra.mxu0 0
      %376 = vmatprep.subr.bf16.mxu0 0
      %377 = vmatpush1.bf16.xpose.msra.mxu0 0
      %378 = vmatprep.subr.bf16.mxu0 0
      %379 = vmatpush1.bf16.xpose.msra.mxu0 0
      %380 = vmatprep.subr.bf16.mxu0 0
      %381 = vmatpush1.bf16.xpose.msra.mxu0 0
      %382 = vmatprep.subr.bf16.mxu0 0
      %383 = vmatpush1.bf16.xpose.msra.mxu0 0
      %384 = vmatprep.mubr.bf16.mxu0 0
      %385 = vmatmul.mubr.bf16.gmra.mrb[0].mxu0 %v347
      %v386 = vpop.f32.mrb[0].mxu0
      %v387 = vadd.f32 0.0, %v386
      %v388 = vpop.f32.mrb[0].mxu0
      %v389 = vpop.f32.mrb[0].mxu0
      %v390 = vadd.f32 0.0, %v389
      %v391 = vpop.f32.mrb[0].mxu0
      %392 = vdwg.mxu0
      %v393 = vmul.f32 %v387, 0.25
      %v394 = vmul.f32 %v390, 0.25
      %v395 = vadd.f32 %v393, %v275
      %v396 = vadd.f32 %v394, %v276
      %vm397 = vcmask 113664
      %v398 = vsel %vm397, %v395, -inf
      %399 = vmax.xlane.f32.xlu0 %v398
      %v400 = vpop.xlane.xlu0 %399
      %vm401 = vcmask 111616
      %v402 = vsel %vm401, %v396, -inf
      %403 = vmax.xlane.f32.xlu0 %v402
      %v404 = vpop.xlane.xlu0 %403
      %v405 = vsub.f32 %v395, %v400
      %v406 = vsub.f32 %v396, %v404
      %v407 = vmul.f32 %v405, 1.442695
      %v408 = vpow.pop %v407
      %v409 = vmul.f32 %v406, 1.442695
      %v410 = vpow.pop %v409
      %v411 = vsel %vm397, %v408, 0.0
      %412 = vadd.xlane.f32.xlu0 %v411
      %v413 = vpop.xlane.xlu0 %412
      %v414 = vsel %vm401, %v410, 0.0
      %415 = vadd.xlane.f32.xlu0 %v414
      %v416 = vpop.xlane.xlu0 %415
      %v417 = vrcp.pop %v413
      %v418 = vrcp.pop %v416
      %vm419 = vcmp.gt.f32.partialorder %v400, -5e+29
      %vm420 = vcmp.gt.f32.partialorder %v404, -5e+29
      %v421 = vsel %vm419, %v417, 0.0
      %v422 = vsel %vm420, %v418, 0.0
      %v423 = vmul.f32 %v408, %v421
      %v424 = vmul.f32 %v410, %v422
      %v425 = vpack.c.bf16 %v424, %v423
      %426 = vrot.lane.b32.xlu0 %v341, 96
      %v427 = vpop.permute.xlu0 %426
      %430 = vrot.lane.b32.xlu0 %v335, 80
      %v431 = vpop.permute.xlu0 %430
      %432 = vrot.lane.b32.xlu0 %v338, 80
      %v433 = vpop.permute.xlu0 %432
      %v437 = vsel %vm397, %v425, 0
      %vm439 = vcmask 1046528
      %v441 = vsel %vm439, %v427, 0
      %443 = vmatprep.subr.bf16.mxu0 0
      %444 = vmatpush1.bf16.msra.mxu0 %v441
      %445 = vmatprep.subr.bf16.mxu0 0
      %446 = vmatpush1.bf16.msra.mxu0 0
      %447 = vmatprep.subr.bf16.mxu0 0
      %448 = vmatpush1.bf16.msra.mxu0 0
      %449 = vmatprep.subr.bf16.mxu0 0
      %450 = vmatpush1.bf16.msra.mxu0 0
      %451 = vmatprep.subr.bf16.mxu0 0
      %452 = vmatpush1.bf16.msra.mxu0 0
      %453 = vmatprep.subr.bf16.mxu0 0
      %454 = vmatpush1.bf16.msra.mxu0 0
      %455 = vmatprep.subr.bf16.mxu0 0
      %456 = vmatpush1.bf16.msra.mxu0 0
      %457 = vmatprep.subr.bf16.mxu0 0
      %458 = vmatpush1.bf16.msra.mxu0 0
      %459 = vmatprep.subr.bf16.mxu0 0
      %460 = vmatpush1.bf16.msra.mxu0 0
      %461 = vmatprep.subr.bf16.mxu0 0
      %462 = vmatpush1.bf16.msra.mxu0 0
      %463 = vmatprep.subr.bf16.mxu0 0
      %464 = vmatpush1.bf16.msra.mxu0 0
      %465 = vmatprep.subr.bf16.mxu0 0
      %466 = vmatpush1.bf16.msra.mxu0 0
      %467 = vmatprep.subr.bf16.mxu0 0
      %468 = vmatpush1.bf16.msra.mxu0 0
      %469 = vmatprep.subr.bf16.mxu0 0
      %470 = vmatpush1.bf16.msra.mxu0 0
      %471 = vmatprep.subr.bf16.mxu0 0
      %472 = vmatpush1.bf16.msra.mxu0 0
      %473 = vmatprep.subr.bf16.mxu0 0
      %474 = vmatpush1.bf16.msra.mxu0 0
      %475 = vmatprep.mubr.bf16.mxu0 0
      %476 = vmatmul.mubr.bf16.gmra.mrb[0].mxu0 %v437
      %v477 = vpop.f32.mrb[0].mxu0
      %v478 = vadd.f32 %v431, %v477
      %v479 = vpop.f32.mrb[0].mxu0
      %v480 = vpop.f32.mrb[0].mxu0
      %v481 = vadd.f32 %v433, %v480
      %v482 = vpop.f32.mrb[0].mxu0
      %483 = vdwg.mxu0
      %v484 = vsel %vm345, %v478, 0.0
      %vm485 = vcmask 128000
      %v486 = vsel %vm485, %v481, 0.0
      %v487 = vadd.f32 %v484, %v486
      %v488 = vrot.slane %v487, 4
      %v489 = vadd.f32 %v487, %v488
      %v490 = vrot.slane %v489, 2
      %v491 = vadd.f32 %v489, %v490
      %v492 = vrot.slane %v491, 1
      %v493 = vadd.f32 %v491, %v492
      %v494 = vrcp.pop 14.0
      %v495 = vmul.f32 %v493, %v494
      %v496 = vsub.f32 %v478, %v495
      %v497 = vsub.f32 %v481, %v495
      %v498 = vmul.f32 %v496, %v496
      %v499 = vmul.f32 %v497, %v497
      %v500 = vsel %vm345, %v498, 0.0
      %v501 = vsel %vm485, %v499, 0.0
      %v502 = vadd.f32 %v500, %v501
      %v503 = vrot.slane %v502, 4
      %v504 = vadd.f32 %v502, %v503
      %v505 = vrot.slane %v504, 2
      %v506 = vadd.f32 %v504, %v505
      %v507 = vrot.slane %v506, 1
      %v508 = vadd.f32 %v506, %v507
      %v509 = vmul.f32 %v508, %v494
      %v510 = vadd.f32 %v509, 1e-05
      %v511 = vrsqrt.pop %v510
      %v512 = vmul.f32 %v496, %v511
      %v513 = vmul.f32 %v497, %v511
      %v514 = vld [vmem:[%s4] sm:$0xf]
      %v515 = vld [vmem:[%s4 + $0x4] sm:$0xf]
      %v516 = vpack.c.bf16 %v513, %v512
      %v517 = vld [vmem:[%s5] sm:$0x1]
      %v519 = vlaneseq
      %v520 = vshrl.u32 %v519, 7
      %v521 = vsub.s32 0, %v520
      %v522 = vrot.slane %v517, %v521
      %v526 = vunpack.c.l.b16 %v514
      %v527 = vunpack.c.l.b16 %v515
      %v528 = vpack.c.b16 %v527, %v526
      %v531 = vsel %vm345, %v516, 0
      %533 = vmatprep.subr.bf16.mxu0 0
      %534 = vmatpush1.bf16.msra.mxu0 %v528
      %535 = vmatprep.subr.bf16.mxu0 0
      %536 = vmatpush1.bf16.msra.mxu0 0
      %537 = vmatprep.subr.bf16.mxu0 0
      %538 = vmatpush1.bf16.msra.mxu0 0
      %539 = vmatprep.subr.bf16.mxu0 0
      %540 = vmatpush1.bf16.msra.mxu0 0
      %541 = vmatprep.subr.bf16.mxu0 0
      %542 = vmatpush1.bf16.msra.mxu0 0
      %543 = vmatprep.subr.bf16.mxu0 0
      %544 = vmatpush1.bf16.msra.mxu0 0
      %545 = vmatprep.subr.bf16.mxu0 0
      %546 = vmatpush1.bf16.msra.mxu0 0
      %547 = vmatprep.subr.bf16.mxu0 0
      %548 = vmatpush1.bf16.msra.mxu0 0
      %549 = vmatprep.subr.bf16.mxu0 0
      %550 = vmatpush1.bf16.msra.mxu0 0
      %551 = vmatprep.subr.bf16.mxu0 0
      %552 = vmatpush1.bf16.msra.mxu0 0
      %553 = vmatprep.subr.bf16.mxu0 0
      %554 = vmatpush1.bf16.msra.mxu0 0
      %555 = vmatprep.subr.bf16.mxu0 0
      %556 = vmatpush1.bf16.msra.mxu0 0
      %557 = vmatprep.subr.bf16.mxu0 0
      %558 = vmatpush1.bf16.msra.mxu0 0
      %559 = vmatprep.subr.bf16.mxu0 0
      %560 = vmatpush1.bf16.msra.mxu0 0
      %561 = vmatprep.subr.bf16.mxu0 0
      %562 = vmatpush1.bf16.msra.mxu0 0
      %563 = vmatprep.subr.bf16.mxu0 0
      %564 = vmatpush1.bf16.msra.mxu0 0
      %565 = vmatprep.mubr.bf16.mxu0 0
      %566 = vmatmul.mubr.bf16.gmra.mrb[0].mxu0 %v531
      %v567 = vpop.f32.mrb[0].mxu0
      %v568 = vadd.f32 %v522, %v567
      %v569 = vpop.f32.mrb[0].mxu0
      %v570 = vpop.f32.mrb[0].mxu0
      %v571 = vadd.f32 %v522, %v570
      %v572 = vpop.f32.mrb[0].mxu0
      %573 = vdwg.mxu0
      %v574 = vpack.c.bf16 %v571, %v568
      %576 = vrot.lane.b32.xlu0 %v574, 120
      %v577 = vpop.permute.xlu0 %576
      %vm578 = vcmask 64512
      %v580 = vsel %vm578, %v574, 0
      %v583 = vsel %vm578, %v577, 0
      %585 = vmatprep.subr.bf16.mxu0 0
      %586 = vmatpush1.bf16.xpose.msra.mxu0 %v583
      %587 = vmatprep.subr.bf16.mxu0 0
      %588 = vmatpush1.bf16.xpose.msra.mxu0 0
      %589 = vmatprep.subr.bf16.mxu0 0
      %590 = vmatpush1.bf16.xpose.msra.mxu0 0
      %591 = vmatprep.subr.bf16.mxu0 0
      %592 = vmatpush1.bf16.xpose.msra.mxu0 0
      %593 = vmatprep.subr.bf16.mxu0 0
      %594 = vmatpush1.bf16.xpose.msra.mxu0 0
      %595 = vmatprep.subr.bf16.mxu0 0
      %596 = vmatpush1.bf16.xpose.msra.mxu0 0
      %597 = vmatprep.subr.bf16.mxu0 0
      %598 = vmatpush1.bf16.xpose.msra.mxu0 0
      %599 = vmatprep.subr.bf16.mxu0 0
      %600 = vmatpush1.bf16.xpose.msra.mxu0 0
      %601 = vmatprep.subr.bf16.mxu0 0
      %602 = vmatpush1.bf16.xpose.msra.mxu0 0
      %603 = vmatprep.subr.bf16.mxu0 0
      %604 = vmatpush1.bf16.xpose.msra.mxu0 0
      %605 = vmatprep.subr.bf16.mxu0 0
      %606 = vmatpush1.bf16.xpose.msra.mxu0 0
      %607 = vmatprep.subr.bf16.mxu0 0
      %608 = vmatpush1.bf16.xpose.msra.mxu0 0
      %609 = vmatprep.subr.bf16.mxu0 0
      %610 = vmatpush1.bf16.xpose.msra.mxu0 0
      %611 = vmatprep.subr.bf16.mxu0 0
      %612 = vmatpush1.bf16.xpose.msra.mxu0 0
      %613 = vmatprep.subr.bf16.mxu0 0
      %614 = vmatpush1.bf16.xpose.msra.mxu0 0
      %615 = vmatprep.subr.bf16.mxu0 0
      %616 = vmatpush1.bf16.xpose.msra.mxu0 0
      %617 = vmatprep.mubr.bf16.mxu0 0
      %618 = vmatmul.mubr.bf16.gmra.mrb[0].mxu0 %v580
      %v619 = vpop.f32.mrb[0].mxu0
      %v620 = vadd.f32 0.0, %v619
      %v621 = vpop.f32.mrb[0].mxu0
      %v622 = vpop.f32.mrb[0].mxu0
      %v623 = vadd.f32 0.0, %v622
      %v624 = vpop.f32.mrb[0].mxu0
      %625 = vdwg.mxu0
      %v626 = vmul.f32 %v620, 0.35355338
      %v627 = vmul.f32 %v623, 0.35355338
      %v628 = vadd.f32 %v626, %v275
      %v629 = vadd.f32 %v627, %v276
      %v630 = vsel %vm397, %v628, -inf
      %631 = vmax.xlane.f32.xlu0 %v630
      %v632 = vpop.xlane.xlu0 %631
      %v633 = vsel %vm401, %v629, -inf
      %634 = vmax.xlane.f32.xlu0 %v633
      %v635 = vpop.xlane.xlu0 %634
      %v636 = vsub.f32 %v628, %v632
      %v637 = vsub.f32 %v629, %v635
      %v638 = vmul.f32 %v636, 1.442695
      %v639 = vpow.pop %v638
      %v640 = vmul.f32 %v637, 1.442695
      %v641 = vpow.pop %v640
      %v642 = vsel %vm397, %v639, 0.0
      %643 = vadd.xlane.f32.xlu0 %v642
      %v644 = vpop.xlane.xlu0 %643
      %v645 = vsel %vm401, %v641, 0.0
      %646 = vadd.xlane.f32.xlu0 %v645
      %v647 = vpop.xlane.xlu0 %646
      %v648 = vrcp.pop %v644
      %v649 = vrcp.pop %v647
      %vm650 = vcmp.gt.f32.partialorder %v632, -5e+29
      %vm651 = vcmp.gt.f32.partialorder %v635, -5e+29
      %v652 = vsel %vm650, %v648, 0.0
      %v653 = vsel %vm651, %v649, 0.0
      %v654 = vmul.f32 %v639, %v652
      %v655 = vmul.f32 %v641, %v653
      %v656 = vpack.c.bf16 %v655, %v654
      %657 = vrot.lane.b32.xlu0 %v574, 112
      %v658 = vpop.permute.xlu0 %657
      %661 = vrot.lane.b32.xlu0 %v568, 104
      %v662 = vpop.permute.xlu0 %661
      %663 = vrot.lane.b32.xlu0 %v571, 104
      %v664 = vpop.permute.xlu0 %663
      %v668 = vsel %vm397, %v656, 0
      %v671 = vsel %vm439, %v658, 0
      %673 = vmatprep.subr.bf16.mxu0 0
      %674 = vmatpush1.bf16.msra.mxu0 %v671
      %675 = vmatprep.subr.bf16.mxu0 0
      %676 = vmatpush1.bf16.msra.mxu0 0
      %677 = vmatprep.subr.bf16.mxu0 0
      %678 = vmatpush1.bf16.msra.mxu0 0
      %679 = vmatprep.subr.bf16.mxu0 0
      %680 = vmatpush1.bf16.msra.mxu0 0
      %681 = vmatprep.subr.bf16.mxu0 0
      %682 = vmatpush1.bf16.msra.mxu0 0
      %683 = vmatprep.subr.bf16.mxu0 0
      %684 = vmatpush1.bf16.msra.mxu0 0
      %685 = vmatprep.subr.bf16.mxu0 0
      %686 = vmatpush1.bf16.msra.mxu0 0
      %687 = vmatprep.subr.bf16.mxu0 0
      %688 = vmatpush1.bf16.msra.mxu0 0
      %689 = vmatprep.subr.bf16.mxu0 0
      %690 = vmatpush1.bf16.msra.mxu0 0
      %691 = vmatprep.subr.bf16.mxu0 0
      %692 = vmatpush1.bf16.msra.mxu0 0
      %693 = vmatprep.subr.bf16.mxu0 0
      %694 = vmatpush1.bf16.msra.mxu0 0
      %695 = vmatprep.subr.bf16.mxu0 0
      %696 = vmatpush1.bf16.msra.mxu0 0
      %697 = vmatprep.subr.bf16.mxu0 0
      %698 = vmatpush1.bf16.msra.mxu0 0
      %699 = vmatprep.subr.bf16.mxu0 0
      %700 = vmatpush1.bf16.msra.mxu0 0
      %701 = vmatprep.subr.bf16.mxu0 0
      %702 = vmatpush1.bf16.msra.mxu0 0
      %703 = vmatprep.subr.bf16.mxu0 0
      %704 = vmatpush1.bf16.msra.mxu0 0
      %705 = vmatprep.mubr.bf16.mxu0 0
      %706 = vmatmul.mubr.bf16.gmra.mrb[0].mxu0 %v668
      %v707 = vpop.f32.mrb[0].mxu0
      %v708 = vadd.f32 %v662, %v707
      %v709 = vpop.f32.mrb[0].mxu0
      %v710 = vpop.f32.mrb[0].mxu0
      %v711 = vadd.f32 %v664, %v710
      %v712 = vpop.f32.mrb[0].mxu0
      %713 = vdwg.mxu0
      %v714 = vsel %vm578, %v708, 0.0
      %vm715 = vcmask 62464
      %v716 = vsel %vm715, %v711, 0.0
      %v717 = vadd.f32 %v714, %v716
      %v718 = vrot.slane %v717, 4
      %v719 = vadd.f32 %v717, %v718
      %v720 = vrot.slane %v719, 2
      %v721 = vadd.f32 %v719, %v720
      %v722 = vrot.slane %v721, 1
      %v723 = vadd.f32 %v721, %v722
      %v724 = vmul.f32 %v723, %v494
      %v725 = vsub.f32 %v708, %v724
      %v726 = vsub.f32 %v711, %v724
      %v727 = vmul.f32 %v725, %v725
      %v728 = vmul.f32 %v726, %v726
      %v729 = vsel %vm578, %v727, 0.0
      %v730 = vsel %vm715, %v728, 0.0
      %v731 = vadd.f32 %v729, %v730
      %v732 = vrot.slane %v731, 4
      %v733 = vadd.f32 %v731, %v732
      %v734 = vrot.slane %v733, 2
      %v735 = vadd.f32 %v733, %v734
      %v736 = vrot.slane %v735, 1
      %v737 = vadd.f32 %v735, %v736
      %v738 = vmul.f32 %v737, %v494
      %v739 = vadd.f32 %v738, 1e-05
      %v740 = vrsqrt.pop %v739
      %v741 = vmul.f32 %v725, %v740
      %v742 = vmul.f32 %v726, %v740
      %v743 = vmax.f32 %v741, 0.0
      %v744 = vmax.f32 %v742, 0.0
      %745 = vst.msk [vmem:[%s271] sm:$0xff] %vm578, %v743
      %746 = vst.msk [vmem:[%s271 + $0x8] sm:$0x3f] %vm715, %v744
      %p747 = scmp.lt.s32.totalorder %s17, 7
      %s748 = scalar_select %p747, %s17, 7
      %s749 = smul.addr %s748, 2
      %s750 = smul.addr %s749, 8
      %s751 = scalar_lea.vmem %s6, %s750
      // Predicated region
      $region45: #{gecnvnet_forward.2} parent=43 // pred_check
        %p752 = pneg %p171
      $region46: #{gecnvnet_forward.2} parent=43 // pred_check_branch
        %754 = sbr.rel (%p752) target = $region48
      $region47: #{gecnvnet_forward.2} parent=43 // pred_region
        _
      $region48: #{gecnvnet_forward.2} parent=43 // pred_fallthru
        _
    $region44: #{gecnvnet_forward.2} parent=5 // pred_fallthru
      _
    %p755 = scmp.le.s32.totalorder 2, %s12
    // Predicated region
    $region49: #{gecnvnet_forward.2} parent=5 // pred_check
      %p756 = pneg %p755
    $region50: #{gecnvnet_forward.2} parent=5 // pred_check_branch
      %758 = sbr.rel (%p756) target = $region52
    $region51: #{gecnvnet_forward.2} parent=5 // pred_region
      %s759 = ssub.s32 %s12, 2
      // Predicated region
      $region53: #{gecnvnet_forward.2} parent=51 // pred_check
        %p760 = pneg %p177
      $region54: #{gecnvnet_forward.2} parent=51 // pred_check_branch
        %762 = sbr.rel (%p760) target = $region56
      $region55: #{gecnvnet_forward.2} parent=51 // pred_region
        %p763 = scmp.lt.s32.totalorder %s18, 7
        %s764 = scalar_select %p763, %s18, 7
        %s765 = smul.addr %s764, 2
        %s766 = smul.addr %s765, 8
        %s767 = scalar_lea.vmem %s6, %s766
      $region56: #{gecnvnet_forward.2} parent=51 // pred_fallthru
        _
    $region52: #{gecnvnet_forward.2} parent=5 // pred_fallthru
      _
  $region6: #{gecnvnet_forward.2} parent=0 // loop_footer
    %s16 = sadd.s32 1, %s12
  $region7: #{gecnvnet_forward.2} parent=0 // loop_footer_branch
    %11 = sbr.rel target = $region3
  $region8: #{gecnvnet_forward.2} parent=0 // loop_exit
    _

// kernel: gecnvnet_forward.3
$region0: #{gecnvnet_forward.3}
  #allocation0 [shape = 'u32[]', space=smem, size = 0x4, offset = 0x4, fixed_abs, tag = 'smem constant byte address 0x4 - core index']
  #allocation1 [shape = 'u32[144,128]{1,0:T(1,128)}', space=vmem, size = 0x12000, scoped, tag = 'internal scratch']
  #allocation2 [shape = 'f32[8,8,8]{2,1,0:T(8,128)}', space=vmem, size = 0x8000, scoped, tag = 'scratch operand']
  %s0 = inlined_call_operand.vmem [shape: f32[16,8,7], index: 0, kind: input, shape index: {}]
  %s1 = inlined_call_operand.vmem [shape: bf16[64,32], index: 1, kind: input, shape index: {}]
  %s2 = inlined_call_operand.vmem [shape: f32[1,32], index: 2, kind: input, shape index: {}]
  %s3 = inlined_call_operand.vmem [shape: bf16[32,16], index: 3, kind: input, shape index: {}]
  %s4 = inlined_call_operand.vmem [shape: f32[1,16], index: 4, kind: input, shape index: {}]
  %s5 = inlined_call_operand.vmem [shape: bf16[16,128], index: 5, kind: input, shape index: {}]
  %s6 = inlined_call_operand.vmem [shape: f32[16,128], index: 6, kind: output, shape index: {}]
  %s7 = sld [smem:[#allocation0]]
  $region57: #{gecnvnet_forward.3} parent=0
    _
  %s9 = ssub.s32 1, %s7
  %s10 = scalar_select 0, %s9, %s7
  loop: start=0, step=1, limit=4
  $region2: #{gecnvnet_forward.3} parent=0 // loop_pre_header
    _
  $region3: #{gecnvnet_forward.3} parent=0 // loop_header
    %s12 = sphi 0, %s16
    %p13 = scmp.ge.s32.totalorder %s12, 4
    %s22 = sphi 0, %s24
    %s25 = sphi 0, %s22
    %s26 = sphi 0, %s25
    %s42 = sphi 0, %s26
    %s46 = sphi 0, %s46
    %s48 = sphi 0, %s46
    %s49 = sphi 0, %s48
    %s63 = sphi 0, %s49
    %s67 = sphi 0, %s67
    %s69 = sphi 0, %s67
    %s70 = sphi 0, %s69
    %s84 = sphi 0, %s70
    %s88 = sphi 0, %s88
    %s90 = sphi 0, %s88
    %s91 = sphi 0, %s90
    %s105 = sphi 0, %s91
    %s109 = sphi 0, %s109
    %s111 = sphi 0, %s109
    %s112 = sphi 0, %s111
    %s126 = sphi 0, %s112
    %s130 = sphi 0, %s130
    %s132 = sphi 0, %s130
    %s133 = sphi 0, %s132
    %s147 = sphi 0, %s133
    %s153 = sphi 0, %s155
    %s156 = sphi 0, %s153
    %s157 = sphi 0, %s156
    %s173 = sphi 0, %s157
  $region4: #{gecnvnet_forward.3} parent=0 // loop_header_branch
    %15 = sbr.rel (%p13) target = $region8
  $region5: #{gecnvnet_forward.3} parent=0 // loop_body
    %s17 = ssub.s32 %s12, 1
    %s18 = ssub.s32 %s12, 2
    %s19 = sadd.s32 %s12, 1
    %s20 = ssub.s32 %s12, %s19
    %p21 = scmp.eq.s32.totalorder %s20, 0
    %s23 = sadd.s32 %s22, 1
    %s24 = scalar_select %p21, %s22, %s23
    %p27 = pneg %p21
    %p28 = scmp.eq.s32.totalorder %s12, 1
    %p29 = por %p27, %p28
    %p30 = scmp.ne.s32.totalorder %s22, %s25
    %p31 = scmp.eq.s32.totalorder %s12, 0
    %p32 = por %p30, %p31
    %p33 = scmp.ne.s32.totalorder %s22, %s25
    %p34 = scmp.eq.s32.totalorder %s17, 1
    %p35 = por %p33, %p34
    %p36 = scmp.ne.s32.totalorder %s25, %s26
    %p37 = scmp.eq.s32.totalorder %s17, 0
    %p38 = por %p36, %p37
    %p39 = scmp.ne.s32.totalorder %s25, %s26
    %p40 = scmp.eq.s32.totalorder %s18, 1
    %p41 = por %p39, %p40
    %p43 = scmp.ne.s32.totalorder %s26, %s42
    %p44 = scmp.eq.s32.totalorder %s18, 0
    %p45 = por %p43, %p44
    %s47 = sadd.s32 %s46, 1
    %p50 = scmp.eq.s32.totalorder %s12, 1
    %p51 = scmp.ne.s32.totalorder %s46, %s48
    %p52 = scmp.eq.s32.totalorder %s12, 0
    %p53 = por %p51, %p52
    %p54 = scmp.ne.s32.totalorder %s46, %s48
    %p55 = scmp.eq.s32.totalorder %s17, 1
    %p56 = por %p54, %p55
    %p57 = scmp.ne.s32.totalorder %s48, %s49
    %p58 = scmp.eq.s32.totalorder %s17, 0
    %p59 = por %p57, %p58
    %p60 = scmp.ne.s32.totalorder %s48, %s49
    %p61 = scmp.eq.s32.totalorder %s18, 1
    %p62 = por %p60, %p61
    %p64 = scmp.ne.s32.totalorder %s49, %s63
    %p65 = scmp.eq.s32.totalorder %s18, 0
    %p66 = por %p64, %p65
    %s68 = sadd.s32 %s67, 1
    %p71 = scmp.eq.s32.totalorder %s12, 1
    %p72 = scmp.ne.s32.totalorder %s67, %s69
    %p73 = scmp.eq.s32.totalorder %s12, 0
    %p74 = por %p72, %p73
    %p75 = scmp.ne.s32.totalorder %s67, %s69
    %p76 = scmp.eq.s32.totalorder %s17, 1
    %p77 = por %p75, %p76
    %p78 = scmp.ne.s32.totalorder %s69, %s70
    %p79 = scmp.eq.s32.totalorder %s17, 0
    %p80 = por %p78, %p79
    %p81 = scmp.ne.s32.totalorder %s69, %s70
    %p82 = scmp.eq.s32.totalorder %s18, 1
    %p83 = por %p81, %p82
    %p85 = scmp.ne.s32.totalorder %s70, %s84
    %p86 = scmp.eq.s32.totalorder %s18, 0
    %p87 = por %p85, %p86
    %s89 = sadd.s32 %s88, 1
    %p92 = scmp.eq.s32.totalorder %s12, 1
    %p93 = scmp.ne.s32.totalorder %s88, %s90
    %p94 = scmp.eq.s32.totalorder %s12, 0
    %p95 = por %p93, %p94
    %p96 = scmp.ne.s32.totalorder %s88, %s90
    %p97 = scmp.eq.s32.totalorder %s17, 1
    %p98 = por %p96, %p97
    %p99 = scmp.ne.s32.totalorder %s90, %s91
    %p100 = scmp.eq.s32.totalorder %s17, 0
    %p101 = por %p99, %p100
    %p102 = scmp.ne.s32.totalorder %s90, %s91
    %p103 = scmp.eq.s32.totalorder %s18, 1
    %p104 = por %p102, %p103
    %p106 = scmp.ne.s32.totalorder %s91, %s105
    %p107 = scmp.eq.s32.totalorder %s18, 0
    %p108 = por %p106, %p107
    %s110 = sadd.s32 %s109, 1
    %p113 = scmp.eq.s32.totalorder %s12, 1
    %p114 = scmp.ne.s32.totalorder %s109, %s111
    %p115 = scmp.eq.s32.totalorder %s12, 0
    %p116 = por %p114, %p115
    %p117 = scmp.ne.s32.totalorder %s109, %s111
    %p118 = scmp.eq.s32.totalorder %s17, 1
    %p119 = por %p117, %p118
    %p120 = scmp.ne.s32.totalorder %s111, %s112
    %p121 = scmp.eq.s32.totalorder %s17, 0
    %p122 = por %p120, %p121
    %p123 = scmp.ne.s32.totalorder %s111, %s112
    %p124 = scmp.eq.s32.totalorder %s18, 1
    %p125 = por %p123, %p124
    %p127 = scmp.ne.s32.totalorder %s112, %s126
    %p128 = scmp.eq.s32.totalorder %s18, 0
    %p129 = por %p127, %p128
    %s131 = sadd.s32 %s130, 1
    %p134 = scmp.eq.s32.totalorder %s12, 1
    %p135 = scmp.ne.s32.totalorder %s130, %s132
    %p136 = scmp.eq.s32.totalorder %s12, 0
    %p137 = por %p135, %p136
    %p138 = scmp.ne.s32.totalorder %s130, %s132
    %p139 = scmp.eq.s32.totalorder %s17, 1
    %p140 = por %p138, %p139
    %p141 = scmp.ne.s32.totalorder %s132, %s133
    %p142 = scmp.eq.s32.totalorder %s17, 0
    %p143 = por %p141, %p142
    %p144 = scmp.ne.s32.totalorder %s132, %s133
    %p145 = scmp.eq.s32.totalorder %s18, 1
    %p146 = por %p144, %p145
    %p148 = scmp.ne.s32.totalorder %s133, %s147
    %p149 = scmp.eq.s32.totalorder %s18, 0
    %p150 = por %p148, %p149
    %s151 = ssub.s32 %s12, %s19
    %p152 = scmp.eq.s32.totalorder %s151, 0
    %s154 = sadd.s32 %s153, 1
    %s155 = scalar_select %p152, %s153, %s154
    %p158 = pneg %p152
    %p159 = scmp.eq.s32.totalorder %s12, 1
    %p160 = por %p158, %p159
    %p161 = scmp.ne.s32.totalorder %s153, %s156
    %p162 = scmp.eq.s32.totalorder %s12, 0
    %p163 = por %p161, %p162
    %p164 = scmp.ne.s32.totalorder %s153, %s156
    %p165 = scmp.eq.s32.totalorder %s17, 1
    %p166 = por %p164, %p165
    %p167 = scmp.ne.s32.totalorder %s156, %s157
    %p168 = scmp.eq.s32.totalorder %s17, 0
    %p169 = por %p167, %p168
    %p170 = scmp.ne.s32.totalorder %s156, %s157
    %p171 = scmp.eq.s32.totalorder %s18, 1
    %p172 = por %p170, %p171
    %p174 = scmp.ne.s32.totalorder %s157, %s173
    %p175 = scmp.eq.s32.totalorder %s18, 0
    %p176 = por %p174, %p175
    %p177 = scmp.le.s32.totalorder 1, %s12
    %p178 = scmp.lt.s32.totalorder %s12, 3
    %p179 = pnand %p177, %p178
    %p180 = pneg %p179
    // Predicated region
    $region9: #{gecnvnet_forward.3} parent=5 // pred_check
      _
    $region10: #{gecnvnet_forward.3} parent=5 // pred_check_branch
      %182 = sbr.rel (%p179) target = $region12
    $region11: #{gecnvnet_forward.3} parent=5 // pred_region
      %s183 = ssub.s32 %s12, 1
      // Predicated region
      $region13: #{gecnvnet_forward.3} parent=11 // pred_check
        %p184 = pneg %p59
      $region14: #{gecnvnet_forward.3} parent=11 // pred_check_branch
        %186 = sbr.rel (%p184) target = $region16
      $region15: #{gecnvnet_forward.3} parent=11 // pred_region
        _
      $region16: #{gecnvnet_forward.3} parent=11 // pred_fallthru
        _
      // Predicated region
      $region17: #{gecnvnet_forward.3} parent=11 // pred_check
        %p187 = pneg %p80
      $region18: #{gecnvnet_forward.3} parent=11 // pred_check_branch
        %189 = sbr.rel (%p187) target = $region20
      $region19: #{gecnvnet_forward.3} parent=11 // pred_region
        _
      $region20: #{gecnvnet_forward.3} parent=11 // pred_fallthru
        _
      // Predicated region
      $region21: #{gecnvnet_forward.3} parent=11 // pred_check
        %p190 = pneg %p101
      $region22: #{gecnvnet_forward.3} parent=11 // pred_check_branch
        %192 = sbr.rel (%p190) target = $region24
      $region23: #{gecnvnet_forward.3} parent=11 // pred_region
        _
      $region24: #{gecnvnet_forward.3} parent=11 // pred_fallthru
        _
      // Predicated region
      $region25: #{gecnvnet_forward.3} parent=11 // pred_check
        %p193 = pneg %p122
      $region26: #{gecnvnet_forward.3} parent=11 // pred_check_branch
        %195 = sbr.rel (%p193) target = $region28
      $region27: #{gecnvnet_forward.3} parent=11 // pred_region
        _
      $region28: #{gecnvnet_forward.3} parent=11 // pred_fallthru
        _
      // Predicated region
      $region29: #{gecnvnet_forward.3} parent=11 // pred_check
        %p196 = pneg %p143
      $region30: #{gecnvnet_forward.3} parent=11 // pred_check_branch
        %198 = sbr.rel (%p196) target = $region32
      $region31: #{gecnvnet_forward.3} parent=11 // pred_region
        _
      $region32: #{gecnvnet_forward.3} parent=11 // pred_fallthru
        _
    $region12: #{gecnvnet_forward.3} parent=5 // pred_fallthru
      _
    %p199 = scmp.lt.s32.totalorder %s12, 2
    // Predicated region
    $region33: #{gecnvnet_forward.3} parent=5 // pred_check
      %p200 = pneg %p199
    $region34: #{gecnvnet_forward.3} parent=5 // pred_check_branch
      %202 = sbr.rel (%p200) target = $region36
    $region35: #{gecnvnet_forward.3} parent=5 // pred_region
      // Predicated region
      $region37: #{gecnvnet_forward.3} parent=35 // pred_check
        %p203 = pneg %p32
      $region38: #{gecnvnet_forward.3} parent=35 // pred_check_branch
        %205 = sbr.rel (%p203) target = $region40
      $region39: #{gecnvnet_forward.3} parent=35 // pred_region
        %s206 = smul.u32 8, %s12
        %p207 = scmp.lt.s32.totalorder %s206, 15
        %s208 = scalar_select %p207, %s206, 15
        %s209 = smul.addr %s208, 8
        %s210 = scalar_lea.vmem %s0, %s209
        %s211 = smul.u32 8, %s12
      $region40: #{gecnvnet_forward.3} parent=35 // pred_fallthru
        _
    $region36: #{gecnvnet_forward.3} parent=5 // pred_fallthru
      _
    %p212 = scmp.le.s32.totalorder 1, %s12
    %p213 = scmp.lt.s32.totalorder %s12, 3
    %p214 = pnand %p212, %p213
    %p215 = pneg %p214
    // Predicated region
    $region41: #{gecnvnet_forward.3} parent=5 // pred_check
      _
    $region42: #{gecnvnet_forward.3} parent=5 // pred_check_branch
      %217 = sbr.rel (%p214) target = $region44
    $region43: #{gecnvnet_forward.3} parent=5 // pred_region
      %s218 = ssub.s32 %s12, 1
      %s219 = smul.u32 8, %s17
      %p220 = scmp.lt.s32.totalorder %s219, 15
      %s221 = scalar_select %p220, %s219, 15
      %s222 = smul.addr %s221, 8
      %s223 = scalar_lea.vmem %s0, %s222
      %p224 = pneg %p38
      %p225 = pneg %p35
      %p226 = pneg %p59
      %p227 = pneg %p56
      %p228 = pneg %p80
      %p229 = pneg %p77
      %p230 = pneg %p101
      %p231 = pneg %p98
      %p232 = pneg %p122
      %p233 = pneg %p119
      %p234 = pneg %p143
      %p235 = pneg %p140
      %p236 = pneg %p169
      %p237 = pneg %p166
      %p238 = scmp.lt.s32.totalorder %s17, 1
      %s239 = scalar_select %p238, %s17, 1
      %s240 = smul.addr %s239, 8
      %s241 = scalar_lea.vmem %s6, %s240
      %s242 = smul.u32 8, %s17
      %p243 = scmp.lt.s32.totalorder %s242, 15
      %s244 = scalar_select %p243, %s242, 15
      %s245 = smul.addr %s244, 8
      %s246 = scalar_lea.vmem %s0, %s245
      %s247 = smul.u32 8, %s17
      %p248 = scmp.lt.s32.totalorder %s17, 1
      %s249 = scalar_select %p248, %s17, 1
      %s250 = smul.addr %s249, 8
      %s251 = scalar_lea.vmem %s6, %s250
      %v253 = vld [vmem:[%s246] sm:$0xff]
      %v254 = vld [vmem:[%s246 + $0x8] sm:$0xff]
      %v255 = vld [vmem:[%s246 + $0x10] sm:$0xff]
      %v256 = vld [vmem:[%s246 + $0x18] sm:$0xff]
      %v257 = vld [vmem:[%s246 + $0x20] sm:$0xff]
      %v258 = vld [vmem:[%s246 + $0x28] sm:$0xff]
      %v259 = vld [vmem:[%s246 + $0x30] sm:$0xff]
      %v260 = vld [vmem:[%s246 + $0x38] sm:$0xff]
      %v261 = vpack.c.bf16 %v253, %v253
      %v262 = vpack.c.bf16 %v254, %v254
      %v263 = vpack.c.bf16 %v255, %v255
      %v264 = vpack.c.bf16 %v256, %v256
      %v265 = vpack.c.bf16 %v257, %v257
      %v266 = vpack.c.bf16 %v258, %v258
      %v267 = vpack.c.bf16 %v259, %v259
      %v268 = vpack.c.bf16 %v260, %v260
      %vm269 = vcmask 56320
      %v271 = vsel %vm269, %v261, 0
      %273 = vmatprep.subr.bf16.mxu0 0
      %274 = vmatpush1.bf16.xpose.msra.mxu0 %v271
      %275 = vmatprep.subr.bf16.mxu0 0
      %276 = vmatpush1.bf16.xpose.msra.mxu0 0
      %277 = vmatprep.subr.bf16.mxu0 0
      %278 = vmatpush1.bf16.xpose.msra.mxu0 0
      %279 = vmatprep.subr.bf16.mxu0 0
      %280 = vmatpush1.bf16.xpose.msra.mxu0 0
      %281 = vmatprep.subr.bf16.mxu0 0
      %282 = vmatpush1.bf16.xpose.msra.mxu0 0
      %283 = vmatprep.subr.bf16.mxu0 0
      %284 = vmatpush1.bf16.xpose.msra.mxu0 0
      %285 = vmatprep.subr.bf16.mxu0 0
      %286 = vmatpush1.bf16.xpose.msra.mxu0 0
      %287 = vmatprep.subr.bf16.mxu0 0
      %288 = vmatpush1.bf16.xpose.msra.mxu0 0
      %289 = vmatprep.subr.bf16.mxu0 0
      %290 = vmatpush1.bf16.xpose.msra.mxu0 0
      %291 = vmatprep.subr.bf16.mxu0 0
      %292 = vmatpush1.bf16.xpose.msra.mxu0 0
      %293 = vmatprep.subr.bf16.mxu0 0
      %294 = vmatpush1.bf16.xpose.msra.mxu0 0
      %295 = vmatprep.subr.bf16.mxu0 0
      %296 = vmatpush1.bf16.xpose.msra.mxu0 0
      %297 = vmatprep.subr.bf16.mxu0 0
      %298 = vmatpush1.bf16.xpose.msra.mxu0 0
      %299 = vmatprep.subr.bf16.mxu0 0
      %300 = vmatpush1.bf16.xpose.msra.mxu0 0
      %301 = vmatprep.subr.bf16.mxu0 0
      %302 = vmatpush1.bf16.xpose.msra.mxu0 0
      %303 = vmatprep.subr.bf16.mxu0 0
      %304 = vmatpush1.bf16.xpose.msra.mxu0 0
      %305 = vmatprep.mubr.bf16.mxu0 0
      %306 = vmatmul.mubr.bf16.gmra.mrb[0].mxu0 %v271
      %v307 = vpop.f32.mrb[0].mxu0
      %v308 = vadd.f32 0.0, %v307
      %v309 = vpop.f32.mrb[0].mxu0
      %v310 = vpop.f32.mrb[0].mxu0
      %v311 = vpop.f32.mrb[0].mxu0
      %312 = vdwg.mxu0
      %v314 = vsel %vm269, %v262, 0
      %316 = vmatprep.subr.bf16.mxu0 0
      %317 = vmatpush1.bf16.xpose.msra.mxu0 %v314
      %318 = vmatprep.subr.bf16.mxu0 0
      %319 = vmatpush1.bf16.xpose.msra.mxu0 0
      %320 = vmatprep.subr.bf16.mxu0 0
      %321 = vmatpush1.bf16.xpose.msra.mxu0 0
      %322 = vmatprep.subr.bf16.mxu0 0
      %323 = vmatpush1.bf16.xpose.msra.mxu0 0
      %324 = vmatprep.subr.bf16.mxu0 0
      %325 = vmatpush1.bf16.xpose.msra.mxu0 0
      %326 = vmatprep.subr.bf16.mxu0 0
      %327 = vmatpush1.bf16.xpose.msra.mxu0 0
      %328 = vmatprep.subr.bf16.mxu0 0
      %329 = vmatpush1.bf16.xpose.msra.mxu0 0
      %330 = vmatprep.subr.bf16.mxu0 0
      %331 = vmatpush1.bf16.xpose.msra.mxu0 0
      %332 = vmatprep.subr.bf16.mxu0 0
      %333 = vmatpush1.bf16.xpose.msra.mxu0 0
      %334 = vmatprep.subr.bf16.mxu0 0
      %335 = vmatpush1.bf16.xpose.msra.mxu0 0
      %336 = vmatprep.subr.bf16.mxu0 0
      %337 = vmatpush1.bf16.xpose.msra.mxu0 0
      %338 = vmatprep.subr.bf16.mxu0 0
      %339 = vmatpush1.bf16.xpose.msra.mxu0 0
      %340 = vmatprep.subr.bf16.mxu0 0
      %341 = vmatpush1.bf16.xpose.msra.mxu0 0
      %342 = vmatprep.subr.bf16.mxu0 0
      %343 = vmatpush1.bf16.xpose.msra.mxu0 0
      %344 = vmatprep.subr.bf16.mxu0 0
      %345 = vmatpush1.bf16.xpose.msra.mxu0 0
      %346 = vmatprep.subr.bf16.mxu0 0
      %347 = vmatpush1.bf16.xpose.msra.mxu0 0
      %348 = vmatprep.mubr.bf16.mxu0 0
      %349 = vmatmul.mubr.bf16.gmra.mrb[0].mxu0 %v314
      %v350 = vpop.f32.mrb[0].mxu0
      %v351 = vadd.f32 0.0, %v350
      %v352 = vpop.f32.mrb[0].mxu0
      %v353 = vpop.f32.mrb[0].mxu0
      %v354 = vpop.f32.mrb[0].mxu0
      %355 = vdwg.mxu0
      %v357 = vsel %vm269, %v263, 0
      %359 = vmatprep.subr.bf16.mxu0 0
      %360 = vmatpush1.bf16.xpose.msra.mxu0 %v357
      %361 = vmatprep.subr.bf16.mxu0 0
      %362 = vmatpush1.bf16.xpose.msra.mxu0 0
      %363 = vmatprep.subr.bf16.mxu0 0
      %364 = vmatpush1.bf16.xpose.msra.mxu0 0
      %365 = vmatprep.subr.bf16.mxu0 0
      %366 = vmatpush1.bf16.xpose.msra.mxu0 0
      %367 = vmatprep.subr.bf16.mxu0 0
      %368 = vmatpush1.bf16.xpose.msra.mxu0 0
      %369 = vmatprep.subr.bf16.mxu0 0
      %370 = vmatpush1.bf16.xpose.msra.mxu0 0
      %371 = vmatprep.subr.bf16.mxu0 0
      %372 = vmatpush1.bf16.xpose.msra.mxu0 0
      %373 = vmatprep.subr.bf16.mxu0 0
      %374 = vmatpush1.bf16.xpose.msra.mxu0 0
      %375 = vmatprep.subr.bf16.mxu0 0
      %376 = vmatpush1.bf16.xpose.msra.mxu0 0
      %377 = vmatprep.subr.bf16.mxu0 0
      %378 = vmatpush1.bf16.xpose.msra.mxu0 0
      %379 = vmatprep.subr.bf16.mxu0 0
      %380 = vmatpush1.bf16.xpose.msra.mxu0 0
      %381 = vmatprep.subr.bf16.mxu0 0
      %382 = vmatpush1.bf16.xpose.msra.mxu0 0
      %383 = vmatprep.subr.bf16.mxu0 0
      %384 = vmatpush1.bf16.xpose.msra.mxu0 0
      %385 = vmatprep.subr.bf16.mxu0 0
      %386 = vmatpush1.bf16.xpose.msra.mxu0 0
      %387 = vmatprep.subr.bf16.mxu0 0
      %388 = vmatpush1.bf16.xpose.msra.mxu0 0
      %389 = vmatprep.subr.bf16.mxu0 0
      %390 = vmatpush1.bf16.xpose.msra.mxu0 0
      %391 = vmatprep.mubr.bf16.mxu0 0
      %392 = vmatmul.mubr.bf16.gmra.mrb[0].mxu0 %v357
      %v393 = vpop.f32.mrb[0].mxu0
      %v394 = vadd.f32 0.0, %v393
      %v395 = vpop.f32.mrb[0].mxu0
      %v396 = vpop.f32.mrb[0].mxu0
      %v397 = vpop.f32.mrb[0].mxu0
      %398 = vdwg.mxu0
      %v400 = vsel %vm269, %v264, 0
      %402 = vmatprep.subr.bf16.mxu0 0
      %403 = vmatpush1.bf16.xpose.msra.mxu0 %v400
      %404 = vmatprep.subr.bf16.mxu0 0
      %405 = vmatpush1.bf16.xpose.msra.mxu0 0
      %406 = vmatprep.subr.bf16.mxu0 0
      %407 = vmatpush1.bf16.xpose.msra.mxu0 0
      %408 = vmatprep.subr.bf16.mxu0 0
      %409 = vmatpush1.bf16.xpose.msra.mxu0 0
      %410 = vmatprep.subr.bf16.mxu0 0
      %411 = vmatpush1.bf16.xpose.msra.mxu0 0
      %412 = vmatprep.subr.bf16.mxu0 0
      %413 = vmatpush1.bf16.xpose.msra.mxu0 0
      %414 = vmatprep.subr.bf16.mxu0 0
      %415 = vmatpush1.bf16.xpose.msra.mxu0 0
      %416 = vmatprep.subr.bf16.mxu0 0
      %417 = vmatpush1.bf16.xpose.msra.mxu0 0
      %418 = vmatprep.subr.bf16.mxu0 0
      %419 = vmatpush1.bf16.xpose.msra.mxu0 0
      %420 = vmatprep.subr.bf16.mxu0 0
      %421 = vmatpush1.bf16.xpose.msra.mxu0 0
      %422 = vmatprep.subr.bf16.mxu0 0
      %423 = vmatpush1.bf16.xpose.msra.mxu0 0
      %424 = vmatprep.subr.bf16.mxu0 0
      %425 = vmatpush1.bf16.xpose.msra.mxu0 0
      %426 = vmatprep.subr.bf16.mxu0 0
      %427 = vmatpush1.bf16.xpose.msra.mxu0 0
      %428 = vmatprep.subr.bf16.mxu0 0
      %429 = vmatpush1.bf16.xpose.msra.mxu0 0
      %430 = vmatprep.subr.bf16.mxu0 0
      %431 = vmatpush1.bf16.xpose.msra.mxu0 0
      %432 = vmatprep.subr.bf16.mxu0 0
      %433 = vmatpush1.bf16.xpose.msra.mxu0 0
      %434 = vmatprep.mubr.bf16.mxu0 0
      %435 = vmatmul.mubr.bf16.gmra.mrb[0].mxu0 %v400
      %v436 = vpop.f32.mrb[0].mxu0
      %v437 = vadd.f32 0.0, %v436
      %v438 = vpop.f32.mrb[0].mxu0
      %v439 = vpop.f32.mrb[0].mxu0
      %v440 = vpop.f32.mrb[0].mxu0
      %441 = vdwg.mxu0
      %v443 = vsel %vm269, %v265, 0
      %445 = vmatprep.subr.bf16.mxu0 0
      %446 = vmatpush1.bf16.xpose.msra.mxu0 %v443
      %447 = vmatprep.subr.bf16.mxu0 0
      %448 = vmatpush1.bf16.xpose.msra.mxu0 0
      %449 = vmatprep.subr.bf16.mxu0 0
      %450 = vmatpush1.bf16.xpose.msra.mxu0 0
      %451 = vmatprep.subr.bf16.mxu0 0
      %452 = vmatpush1.bf16.xpose.msra.mxu0 0
      %453 = vmatprep.subr.bf16.mxu0 0
      %454 = vmatpush1.bf16.xpose.msra.mxu0 0
      %455 = vmatprep.subr.bf16.mxu0 0
      %456 = vmatpush1.bf16.xpose.msra.mxu0 0
      %457 = vmatprep.subr.bf16.mxu0 0
      %458 = vmatpush1.bf16.xpose.msra.mxu0 0
      %459 = vmatprep.subr.bf16.mxu0 0
      %460 = vmatpush1.bf16.xpose.msra.mxu0 0
      %461 = vmatprep.subr.bf16.mxu0 0
      %462 = vmatpush1.bf16.xpose.msra.mxu0 0
      %463 = vmatprep.subr.bf16.mxu0 0
      %464 = vmatpush1.bf16.xpose.msra.mxu0 0
      %465 = vmatprep.subr.bf16.mxu0 0
      %466 = vmatpush1.bf16.xpose.msra.mxu0 0
      %467 = vmatprep.subr.bf16.mxu0 0
      %468 = vmatpush1.bf16.xpose.msra.mxu0 0
      %469 = vmatprep.subr.bf16.mxu0 0
      %470 = vmatpush1.bf16.xpose.msra.mxu0 0
      %471 = vmatprep.subr.bf16.mxu0 0
      %472 = vmatpush1.bf16.xpose.msra.mxu0 0
      %473 = vmatprep.subr.bf16.mxu0 0
      %474 = vmatpush1.bf16.xpose.msra.mxu0 0
      %475 = vmatprep.subr.bf16.mxu0 0
      %476 = vmatpush1.bf16.xpose.msra.mxu0 0
      %477 = vmatprep.mubr.bf16.mxu0 0
      %478 = vmatmul.mubr.bf16.gmra.mrb[0].mxu0 %v443
      %v479 = vpop.f32.mrb[0].mxu0
      %v480 = vadd.f32 0.0, %v479
      %v481 = vpop.f32.mrb[0].mxu0
      %v482 = vpop.f32.mrb[0].mxu0
      %v483 = vpop.f32.mrb[0].mxu0
      %484 = vdwg.mxu0
      %v486 = vsel %vm269, %v266, 0
      %488 = vmatprep.subr.bf16.mxu0 0
      %489 = vmatpush1.bf16.xpose.msra.mxu0 %v486
      %490 = vmatprep.subr.bf16.mxu0 0
      %491 = vmatpush1.bf16.xpose.msra.mxu0 0
      %492 = vmatprep.subr.bf16.mxu0 0
      %493 = vmatpush1.bf16.xpose.msra.mxu0 0
      %494 = vmatprep.subr.bf16.mxu0 0
      %495 = vmatpush1.bf16.xpose.msra.mxu0 0
      %496 = vmatprep.subr.bf16.mxu0 0
      %497 = vmatpush1.bf16.xpose.msra.mxu0 0
      %498 = vmatprep.subr.bf16.mxu0 0
      %499 = vmatpush1.bf16.xpose.msra.mxu0 0
      %500 = vmatprep.subr.bf16.mxu0 0
      %501 = vmatpush1.bf16.xpose.msra.mxu0 0
      %502 = vmatprep.subr.bf16.mxu0 0
      %503 = vmatpush1.bf16.xpose.msra.mxu0 0
      %504 = vmatprep.subr.bf16.mxu0 0
      %505 = vmatpush1.bf16.xpose.msra.mxu0 0
      %506 = vmatprep.subr.bf16.mxu0 0
      %507 = vmatpush1.bf16.xpose.msra.mxu0 0
      %508 = vmatprep.subr.bf16.mxu0 0
      %509 = vmatpush1.bf16.xpose.msra.mxu0 0
      %510 = vmatprep.subr.bf16.mxu0 0
      %511 = vmatpush1.bf16.xpose.msra.mxu0 0
      %512 = vmatprep.subr.bf16.mxu0 0
      %513 = vmatpush1.bf16.xpose.msra.mxu0 0
      %514 = vmatprep.subr.bf16.mxu0 0
      %515 = vmatpush1.bf16.xpose.msra.mxu0 0
      %516 = vmatprep.subr.bf16.mxu0 0
      %517 = vmatpush1.bf16.xpose.msra.mxu0 0
      %518 = vmatprep.subr.bf16.mxu0 0
      %519 = vmatpush1.bf16.xpose.msra.mxu0 0
      %520 = vmatprep.mubr.bf16.mxu0 0
      %521 = vmatmul.mubr.bf16.gmra.mrb[0].mxu0 %v486
      %v522 = vpop.f32.mrb[0].mxu0
      %v523 = vadd.f32 0.0, %v522
      %v524 = vpop.f32.mrb[0].mxu0
      %v525 = vpop.f32.mrb[0].mxu0
      %v526 = vpop.f32.mrb[0].mxu0
      %527 = vdwg.mxu0
      %v529 = vsel %vm269, %v267, 0
      %531 = vmatprep.subr.bf16.mxu0 0
      %532 = vmatpush1.bf16.xpose.msra.mxu0 %v529
      %533 = vmatprep.subr.bf16.mxu0 0
      %534 = vmatpush1.bf16.xpose.msra.mxu0 0
      %535 = vmatprep.subr.bf16.mxu0 0
      %536 = vmatpush1.bf16.xpose.msra.mxu0 0
      %537 = vmatprep.subr.bf16.mxu0 0
      %538 = vmatpush1.bf16.xpose.msra.mxu0 0
      %539 = vmatprep.subr.bf16.mxu0 0
      %540 = vmatpush1.bf16.xpose.msra.mxu0 0
      %541 = vmatprep.subr.bf16.mxu0 0
      %542 = vmatpush1.bf16.xpose.msra.mxu0 0
      %543 = vmatprep.subr.bf16.mxu0 0
      %544 = vmatpush1.bf16.xpose.msra.mxu0 0
      %545 = vmatprep.subr.bf16.mxu0 0
      %546 = vmatpush1.bf16.xpose.msra.mxu0 0
      %547 = vmatprep.subr.bf16.mxu0 0
      %548 = vmatpush1.bf16.xpose.msra.mxu0 0
      %549 = vmatprep.subr.bf16.mxu0 0
      %550 = vmatpush1.bf16.xpose.msra.mxu0 0
      %551 = vmatprep.subr.bf16.mxu0 0
      %552 = vmatpush1.bf16.xpose.msra.mxu0 0
      %553 = vmatprep.subr.bf16.mxu0 0
      %554 = vmatpush1.bf16.xpose.msra.mxu0 0
      %555 = vmatprep.subr.bf16.mxu0 0
      %556 = vmatpush1.bf16.xpose.msra.mxu0 0
      %557 = vmatprep.subr.bf16.mxu0 0
      %558 = vmatpush1.bf16.xpose.msra.mxu0 0
      %559 = vmatprep.subr.bf16.mxu0 0
      %560 = vmatpush1.bf16.xpose.msra.mxu0 0
      %561 = vmatprep.subr.bf16.mxu0 0
      %562 = vmatpush1.bf16.xpose.msra.mxu0 0
      %563 = vmatprep.mubr.bf16.mxu0 0
      %564 = vmatmul.mubr.bf16.gmra.mrb[0].mxu0 %v529
      %v565 = vpop.f32.mrb[0].mxu0
      %v566 = vadd.f32 0.0, %v565
      %v567 = vpop.f32.mrb[0].mxu0
      %v568 = vpop.f32.mrb[0].mxu0
      %v569 = vpop.f32.mrb[0].mxu0
      %570 = vdwg.mxu0
      %v572 = vsel %vm269, %v268, 0
      %574 = vmatprep.subr.bf16.mxu0 0
      %575 = vmatpush1.bf16.xpose.msra.mxu0 %v572
      %576 = vmatprep.subr.bf16.mxu0 0
      %577 = vmatpush1.bf16.xpose.msra.mxu0 0
      %578 = vmatprep.subr.bf16.mxu0 0
      %579 = vmatpush1.bf16.xpose.msra.mxu0 0
      %580 = vmatprep.subr.bf16.mxu0 0
      %581 = vmatpush1.bf16.xpose.msra.mxu0 0
      %582 = vmatprep.subr.bf16.mxu0 0
      %583 = vmatpush1.bf16.xpose.msra.mxu0 0
      %584 = vmatprep.subr.bf16.mxu0 0
      %585 = vmatpush1.bf16.xpose.msra.mxu0 0
      %586 = vmatprep.subr.bf16.mxu0 0
      %587 = vmatpush1.bf16.xpose.msra.mxu0 0
      %588 = vmatprep.subr.bf16.mxu0 0
      %589 = vmatpush1.bf16.xpose.msra.mxu0 0
      %590 = vmatprep.subr.bf16.mxu0 0
      %591 = vmatpush1.bf16.xpose.msra.mxu0 0
      %592 = vmatprep.subr.bf16.mxu0 0
      %593 = vmatpush1.bf16.xpose.msra.mxu0 0
      %594 = vmatprep.subr.bf16.mxu0 0
      %595 = vmatpush1.bf16.xpose.msra.mxu0 0
      %596 = vmatprep.subr.bf16.mxu0 0
      %597 = vmatpush1.bf16.xpose.msra.mxu0 0
      %598 = vmatprep.subr.bf16.mxu0 0
      %599 = vmatpush1.bf16.xpose.msra.mxu0 0
      %600 = vmatprep.subr.bf16.mxu0 0
      %601 = vmatpush1.bf16.xpose.msra.mxu0 0
      %602 = vmatprep.subr.bf16.mxu0 0
      %603 = vmatpush1.bf16.xpose.msra.mxu0 0
      %604 = vmatprep.subr.bf16.mxu0 0
      %605 = vmatpush1.bf16.xpose.msra.mxu0 0
      %606 = vmatprep.mubr.bf16.mxu0 0
      %607 = vmatmul.mubr.bf16.gmra.mrb[0].mxu0 %v572
      %v608 = vpop.f32.mrb[0].mxu0
      %v609 = vadd.f32 0.0, %v608
      %v610 = vpop.f32.mrb[0].mxu0
      %v611 = vpop.f32.mrb[0].mxu0
      %v612 = vpop.f32.mrb[0].mxu0
      %613 = vdwg.mxu0
      %vm614 = vcmask 64512
      %615 = vst.msk [vmem:[#allocation2] sm:$0xff] %vm614, %v308
      %616 = vst.msk [vmem:[#allocation2 + $0x8] sm:$0xff] %vm614, %v351
      %617 = vst.msk [vmem:[#allocation2 + $0x10] sm:$0xff] %vm614, %v394
      %618 = vst.msk [vmem:[#allocation2 + $0x18] sm:$0xff] %vm614, %v437
      %619 = vst.msk [vmem:[#allocation2 + $0x20] sm:$0xff] %vm614, %v480
      %620 = vst.msk [vmem:[#allocation2 + $0x28] sm:$0xff] %vm614, %v523
      %621 = vst.msk [vmem:[#allocation2 + $0x30] sm:$0xff] %vm614, %v566
      %622 = vst.msk [vmem:[#allocation2 + $0x38] sm:$0xff] %vm614, %v609
      %v623 = vld [vmem:[#allocation2] sm:$0x1]
      %v624 = vld [vmem:[#allocation2 + $0x8] sm:$0x1]
      %v625 = vld [vmem:[#allocation2 + $0x10] sm:$0x1]
      %v626 = vld [vmem:[#allocation2 + $0x18] sm:$0x1]
      %v627 = vld [vmem:[#allocation2 + $0x20] sm:$0x1]
      %v628 = vld [vmem:[#allocation2 + $0x28] sm:$0x1]
      %v629 = vld [vmem:[#allocation2 + $0x30] sm:$0x1]
      %v630 = vld [vmem:[#allocation2 + $0x38] sm:$0x1]
      %v631 = vld [vmem:[%s1] sm:$0xf]
      %v632 = vpack.c.bf16 %v623, %v623
      %v633 = vpack.c.bf16 %v624, %v624
      %v634 = vpack.c.bf16 %v625, %v625
      %v635 = vpack.c.bf16 %v626, %v626
      %v636 = vpack.c.bf16 %v627, %v627
      %v637 = vpack.c.bf16 %v628, %v628
      %v638 = vpack.c.bf16 %v629, %v629
      %v639 = vpack.c.bf16 %v630, %v630
      %v640 = vld [vmem:[#allocation2 + $0x1] sm:$0x1]
      %v641 = vld [vmem:[#allocation2 + $0x9] sm:$0x1]
      %v642 = vld [vmem:[#allocation2 + $0x11] sm:$0x1]
      %v643 = vld [vmem:[#allocation2 + $0x19] sm:$0x1]
      %v644 = vld [vmem:[#allocation2 + $0x21] sm:$0x1]
      %v645 = vld [vmem:[#allocation2 + $0x29] sm:$0x1]
      %v646 = vld [vmem:[#allocation2 + $0x31] sm:$0x1]
      %v647 = vld [vmem:[#allocation2 + $0x39] sm:$0x1]
      %v648 = vld [vmem:[%s1 + $0x4] sm:$0xf]
      %v649 = vpack.c.bf16 %v640, %v640
      %v650 = vpack.c.bf16 %v641, %v641
      %v651 = vpack.c.bf16 %v642, %v642
      %v652 = vpack.c.bf16 %v643, %v643
      %v653 = vpack.c.bf16 %v644, %v644
      %v654 = vpack.c.bf16 %v645, %v645
      %v655 = vpack.c.bf16 %v646, %v646
      %v656 = vpack.c.bf16 %v647, %v647
      %v665 = vunpack.c.l.b16 %v649
      %v666 = vunpack.c.l.b16 %v650
      %v667 = vunpack.c.l.b16 %v651
      %v668 = vunpack.c.l.b16 %v652
      %v669 = vunpack.c.l.b16 %v653
      %v670 = vunpack.c.l.b16 %v654
      %v671 = vunpack.c.l.b16 %v655
      %v672 = vunpack.c.l.b16 %v656
      %v673 = vrot.slane %v666, 7
      %vm674 = vcmask 1041409
      %v675 = vsel %vm674, %v673, %v665
      %v676 = vrot.slane %v667, 6
      %vm677 = vcmask 1042434
      %v678 = vsel %vm677, %v676, %v675
      %v679 = vrot.slane %v668, 5
      %vm680 = vcmask 1043459
      %v681 = vsel %vm680, %v679, %v678
      %v682 = vrot.slane %v669, 4
      %vm683 = vcmask 1044484
      %v684 = vsel %vm683, %v682, %v681
      %v685 = vrot.slane %v670, 3
      %vm686 = vcmask 1045509
      %v687 = vsel %vm686, %v685, %v684
      %v688 = vrot.slane %v671, 2
      %vm689 = vcmask 1046534
      %v690 = vsel %vm689, %v688, %v687
      %v691 = vrot.slane %v672, 1
      %vm692 = vcmask 1047559
      %v693 = vsel %vm692, %v691, %v690
      %v694 = vpack.c.b16 %v693, %v693
      %v696 = vsel %vm614, %v694, 0
      %vm698 = vcmask 1043456
      %v700 = vsel %vm698, %v648, 0
      %702 = vmatprep.subr.bf16.mxu0 0
      %703 = vmatpush1.bf16.msra.mxu0 %v700
      %704 = vmatprep.subr.bf16.mxu0 0
      %705 = vmatpush1.bf16.msra.mxu0 0
      %706 = vmatprep.subr.bf16.mxu0 0
      %707 = vmatpush1.bf16.msra.mxu0 0
      %708 = vmatprep.subr.bf16.mxu0 0
      %709 = vmatpush1.bf16.msra.mxu0 0
      %710 = vmatprep.subr.bf16.mxu0 0
      %711 = vmatpush1.bf16.msra.mxu0 0
      %712 = vmatprep.subr.bf16.mxu0 0
      %713 = vmatpush1.bf16.msra.mxu0 0
      %714 = vmatprep.subr.bf16.mxu0 0
      %715 = vmatpush1.bf16.msra.mxu0 0
      %716 = vmatprep.subr.bf16.mxu0 0
      %717 = vmatpush1.bf16.msra.mxu0 0
      %718 = vmatprep.subr.bf16.mxu0 0
      %719 = vmatpush1.bf16.msra.mxu0 0
      %720 = vmatprep.subr.bf16.mxu0 0
      %721 = vmatpush1.bf16.msra.mxu0 0
      %722 = vmatprep.subr.bf16.mxu0 0
      %723 = vmatpush1.bf16.msra.mxu0 0
      %724 = vmatprep.subr.bf16.mxu0 0
      %725 = vmatpush1.bf16.msra.mxu0 0
      %726 = vmatprep.subr.bf16.mxu0 0
      %727 = vmatpush1.bf16.msra.mxu0 0
      %728 = vmatprep.subr.bf16.mxu0 0
      %729 = vmatpush1.bf16.msra.mxu0 0
      %730 = vmatprep.subr.bf16.mxu0 0
      %731 = vmatpush1.bf16.msra.mxu0 0
      %732 = vmatprep.subr.bf16.mxu0 0
      %733 = vmatpush1.bf16.msra.mxu0 0
      %734 = vmatprep.mubr.bf16.mxu0 0
      %735 = vmatmul.mubr.bf16.gmra.mrb[0].mxu0 %v696
      %v736 = vpop.f32.mrb[0].mxu0
      %v737 = vadd.f32 0.0, %v736
      %v738 = vpop.f32.mrb[0].mxu0
      %v739 = vpop.f32.mrb[0].mxu0
      %v740 = vpop.f32.mrb[0].mxu0
      %741 = vdwg.mxu0
      %v750 = vunpack.c.l.b16 %v632
      %v751 = vunpack.c.l.b16 %v633
      %v752 = vunpack.c.l.b16 %v634
      %v753 = vunpack.c.l.b16 %v635
      %v754 = vunpack.c.l.b16 %v636
      %v755 = vunpack.c.l.b16 %v637
      %v756 = vunpack.c.l.b16 %v638
      %v757 = vunpack.c.l.b16 %v639
      %v758 = vrot.slane %v751, 7
      %v759 = vsel %vm674, %v758, %v750
      %v760 = vrot.slane %v752, 6
      %v761 = vsel %vm677, %v760, %v759
      %v762 = vrot.slane %v753, 5
      %v763 = vsel %vm680, %v762, %v761
      %v764 = vrot.slane %v754, 4
      %v765 = vsel %vm683, %v764, %v763
      %v766 = vrot.slane %v755, 3
      %v767 = vsel %vm686, %v766, %v765
      %v768 = vrot.slane %v756, 2
      %v769 = vsel %vm689, %v768, %v767
      %v770 = vrot.slane %v757, 1
      %v771 = vsel %vm692, %v770, %v769
      %v772 = vpack.c.b16 %v771, %v771
      %v774 = vsel %vm614, %v772, 0
      %v777 = vsel %vm698, %v631, 0
      %779 = vmatprep.subr.bf16.mxu0 0
      %780 = vmatpush1.bf16.msra.mxu0 %v777
      %781 = vmatprep.subr.bf16.mxu0 0
      %782 = vmatpush1.bf16.msra.mxu0 0
      %783 = vmatprep.subr.bf16.mxu0 0
      %784 = vmatpush1.bf16.msra.mxu0 0
      %785 = vmatprep.subr.bf16.mxu0 0
      %786 = vmatpush1.bf16.msra.mxu0 0
      %787 = vmatprep.subr.bf16.mxu0 0
      %788 = vmatpush1.bf16.msra.mxu0 0
      %789 = vmatprep.subr.bf16.mxu0 0
      %790 = vmatpush1.bf16.msra.mxu0 0
      %791 = vmatprep.subr.bf16.mxu0 0
      %792 = vmatpush1.bf16.msra.mxu0 0
      %793 = vmatprep.subr.bf16.mxu0 0
      %794 = vmatpush1.bf16.msra.mxu0 0
      %795 = vmatprep.subr.bf16.mxu0 0
      %796 = vmatpush1.bf16.msra.mxu0 0
      %797 = vmatprep.subr.bf16.mxu0 0
      %798 = vmatpush1.bf16.msra.mxu0 0
      %799 = vmatprep.subr.bf16.mxu0 0
      %800 = vmatpush1.bf16.msra.mxu0 0
      %801 = vmatprep.subr.bf16.mxu0 0
      %802 = vmatpush1.bf16.msra.mxu0 0
      %803 = vmatprep.subr.bf16.mxu0 0
      %804 = vmatpush1.bf16.msra.mxu0 0
      %805 = vmatprep.subr.bf16.mxu0 0
      %806 = vmatpush1.bf16.msra.mxu0 0
      %807 = vmatprep.subr.bf16.mxu0 0
      %808 = vmatpush1.bf16.msra.mxu0 0
      %809 = vmatprep.subr.bf16.mxu0 0
      %810 = vmatpush1.bf16.msra.mxu0 0
      %811 = vmatprep.mubr.bf16.mxu0 0
      %812 = vmatmul.mubr.bf16.gmra.mrb[0].mxu0 %v774
      %v813 = vpop.f32.mrb[0].mxu0
      %v814 = vadd.f32 %v737, %v813
      %v815 = vpop.f32.mrb[0].mxu0
      %v816 = vpop.f32.mrb[0].mxu0
      %v817 = vpop.f32.mrb[0].mxu0
      %818 = vdwg.mxu0
      %v819 = vld [vmem:[#allocation2 + $0x2] sm:$0x1]
      %v820 = vld [vmem:[#allocation2 + $0xa] sm:$0x1]
      %v821 = vld [vmem:[#allocation2 + $0x12] sm:$0x1]
      %v822 = vld [vmem:[#allocation2 + $0x1a] sm:$0x1]
      %v823 = vld [vmem:[#allocation2 + $0x22] sm:$0x1]
      %v824 = vld [vmem:[#allocation2 + $0x2a] sm:$0x1]
      %v825 = vld [vmem:[#allocation2 + $0x32] sm:$0x1]
      %v826 = vld [vmem:[#allocation2 + $0x3a] sm:$0x1]
      %v827 = vld [vmem:[%s1 + $0x8] sm:$0xf]
      %v828 = vpack.c.bf16 %v819, %v819
      %v829 = vpack.c.bf16 %v820, %v820
      %v830 = vpack.c.bf16 %v821, %v821
      %v831 = vpack.c.bf16 %v822, %v822
      %v832 = vpack.c.bf16 %v823, %v823
      %v833 = vpack.c.bf16 %v824, %v824
      %v834 = vpack.c.bf16 %v825, %v825
      %v835 = vpack.c.bf16 %v826, %v826
      %v844 = vunpack.c.l.b16 %v828
      %v845 = vunpack.c.l.b16 %v829
      %v846 = vunpack.c.l.b16 %v830
      %v847 = vunpack.c.l.b16 %v831
      %v848 = vunpack.c.l.b16 %v832
      %v849 = vunpack.c.l.b16 %v833
      %v850 = vunpack.c.l.b16 %v834
      %v851 = vunpack.c.l.b16 %v835
      %v852 = vrot.slane %v845, 7
      %v853 = vsel %vm674, %v852, %v844
      %v854 = vrot.slane %v846, 6
      %v855 = vsel %vm677, %v854, %v853
      %v856 = vrot.slane %v847, 5
      %v857 = vsel %vm680, %v856, %v855
      %v858 = vrot.slane %v848, 4
      %v859 = vsel %vm683, %v858, %v857
      %v860 = vrot.slane %v849, 3
      %v861 = vsel %vm686, %v860, %v859
      %v862 = vrot.slane %v850, 2
      %v863 = vsel %vm689, %v862, %v861
      %v864 = vrot.slane %v851, 1
      %v865 = vsel %vm692, %v864, %v863
      %v866 = vpack.c.b16 %v865, %v865
      %v868 = vsel %vm614, %v866, 0
      %v871 = vsel %vm698, %v827, 0
      %873 = vmatprep.subr.bf16.mxu0 0
      %874 = vmatpush1.bf16.msra.mxu0 %v871
      %875 = vmatprep.subr.bf16.mxu0 0
      %876 = vmatpush1.bf16.msra.mxu0 0
      %877 = vmatprep.subr.bf16.mxu0 0
      %878 = vmatpush1.bf16.msra.mxu0 0
      %879 = vmatprep.subr.bf16.mxu0 0
      %880 = vmatpush1.bf16.msra.mxu0 0
      %881 = vmatprep.subr.bf16.mxu0 0
      %882 = vmatpush1.bf16.msra.mxu0 0
      %883 = vmatprep.subr.bf16.mxu0 0
      %884 = vmatpush1.bf16.msra.mxu0 0
      %885 = vmatprep.subr.bf16.mxu0 0
      %886 = vmatpush1.bf16.msra.mxu0 0
      %887 = vmatprep.subr.bf16.mxu0 0
      %888 = vmatpush1.bf16.msra.mxu0 0
      %889 = vmatprep.subr.bf16.mxu0 0
      %890 = vmatpush1.bf16.msra.mxu0 0
      %891 = vmatprep.subr.bf16.mxu0 0
      %892 = vmatpush1.bf16.msra.mxu0 0
      %893 = vmatprep.subr.bf16.mxu0 0
      %894 = vmatpush1.bf16.msra.mxu0 0
      %895 = vmatprep.subr.bf16.mxu0 0
      %896 = vmatpush1.bf16.msra.mxu0 0
      %897 = vmatprep.subr.bf16.mxu0 0
      %898 = vmatpush1.bf16.msra.mxu0 0
      %899 = vmatprep.subr.bf16.mxu0 0
      %900 = vmatpush1.bf16.msra.mxu0 0
      %901 = vmatprep.subr.bf16.mxu0 0
      %902 = vmatpush1.bf16.msra.mxu0 0
      %903 = vmatprep.subr.bf16.mxu0 0
      %904 = vmatpush1.bf16.msra.mxu0 0
      %905 = vmatprep.mubr.bf16.mxu0 0
      %906 = vmatmul.mubr.bf16.gmra.mrb[0].mxu0 %v868
      %v907 = vpop.f32.mrb[0].mxu0
      %v908 = vadd.f32 0.0, %v907
      %v909 = vpop.f32.mrb[0].mxu0
      %v910 = vpop.f32.mrb[0].mxu0
      %v911 = vpop.f32.mrb[0].mxu0
      %912 = vdwg.mxu0
      %v913 = vadd.f32 %v814, %v908
      %v914 = vld [vmem:[#allocation2 + $0x3] sm:$0x1]
      %v915 = vld [vmem:[#allocation2 + $0xb] sm:$0x1]
      %v916 = vld [vmem:[#allocation2 + $0x13] sm:$0x1]
      %v917 = vld [vmem:[#allocation2 + $0x1b] sm:$0x1]
      %v918 = vld [vmem:[#allocation2 + $0x23] sm:$0x1]
      %v919 = vld [vmem:[#allocation2 + $0x2b] sm:$0x1]
      %v920 = vld [vmem:[#allocation2 + $0x33] sm:$0x1]
      %v921 = vld [vmem:[#allocation2 + $0x3b] sm:$0x1]
      %v922 = vld [vmem:[%s1 + $0xc] sm:$0xf]
      %v923 = vpack.c.bf16 %v914, %v914
      %v924 = vpack.c.bf16 %v915, %v915
      %v925 = vpack.c.bf16 %v916, %v916
      %v926 = vpack.c.bf16 %v917, %v917
      %v927 = vpack.c.bf16 %v918, %v918
      %v928 = vpack.c.bf16 %v919, %v919
      %v929 = vpack.c.bf16 %v920, %v920
      %v930 = vpack.c.bf16 %v921, %v921
      %v939 = vunpack.c.l.b16 %v923
      %v940 = vunpack.c.l.b16 %v924
      %v941 = vunpack.c.l.b16 %v925
      %v942 = vunpack.c.l.b16 %v926
      %v943 = vunpack.c.l.b16 %v927
      %v944 = vunpack.c.l.b16 %v928
      %v945 = vunpack.c.l.b16 %v929
      %v946 = vunpack.c.l.b16 %v930
      %v947 = vrot.slane %v940, 7
      %v948 = vsel %vm674, %v947, %v939
      %v949 = vrot.slane %v941, 6
      %v950 = vsel %vm677, %v949, %v948
      %v951 = vrot.slane %v942, 5
      %v952 = vsel %vm680, %v951, %v950
      %v953 = vrot.slane %v943, 4
      %v954 = vsel %vm683, %v953, %v952
      %v955 = vrot.slane %v944, 3
      %v956 = vsel %vm686, %v955, %v954
      %v957 = vrot.slane %v945, 2
      %v958 = vsel %vm689, %v957, %v956
      %v959 = vrot.slane %v946, 1
      %v960 = vsel %vm692, %v959, %v958
      %v961 = vpack.c.b16 %v960, %v960
      %v963 = vsel %vm614, %v961, 0
      %v966 = vsel %vm698, %v922, 0
      %968 = vmatprep.subr.bf16.mxu0 0
      %969 = vmatpush1.bf16.msra.mxu0 %v966
      %970 = vmatprep.subr.bf16.mxu0 0
      %971 = vmatpush1.bf16.msra.mxu0 0
      %972 = vmatprep.subr.bf16.mxu0 0
      %973 = vmatpush1.bf16.msra.mxu0 0
      %974 = vmatprep.subr.bf16.mxu0 0
      %975 = vmatpush1.bf16.msra.mxu0 0
      %976 = vmatprep.subr.bf16.mxu0 0
      %977 = vmatpush1.bf16.msra.mxu0 0
      %978 = vmatprep.subr.bf16.mxu0 0
      %979 = vmatpush1.bf16.msra.mxu0 0
      %980 = vmatprep.subr.bf16.mxu0 0
      %981 = vmatpush1.bf16.msra.mxu0 0
      %982 = vmatprep.subr.bf16.mxu0 0
      %983 = vmatpush1.bf16.msra.mxu0 0
      %984 = vmatprep.subr.bf16.mxu0 0
      %985 = vmatpush1.bf16.msra.mxu0 0
      %986 = vmatprep.subr.bf16.mxu0 0
      %987 = vmatpush1.bf16.msra.mxu0 0
      %988 = vmatprep.subr.bf16.mxu0 0
      %989 = vmatpush1.bf16.msra.mxu0 0
      %990 = vmatprep.subr.bf16.mxu0 0
      %991 = vmatpush1.bf16.msra.mxu0 0
      %992 = vmatprep.subr.bf16.mxu0 0
      %993 = vmatpush1.bf16.msra.mxu0 0
      %994 = vmatprep.subr.bf16.mxu0 0
      %995 = vmatpush1.bf16.msra.mxu0 0
      %996 = vmatprep.subr.bf16.mxu0 0
      %997 = vmatpush1.bf16.msra.mxu0 0
      %998 = vmatprep.subr.bf16.mxu0 0
      %999 = vmatpush1.bf16.msra.mxu0 0
      %1000 = vmatprep.mubr.bf16.mxu0 0
      %1001 = vmatmul.mubr.bf16.gmra.mrb[0].mxu0 %v963
      %v1002 = vpop.f32.mrb[0].mxu0
      %v1003 = vadd.f32 0.0, %v1002
      %v1004 = vpop.f32.mrb[0].mxu0
      %v1005 = vpop.f32.mrb[0].mxu0
      %v1006 = vpop.f32.mrb[0].mxu0
      %1007 = vdwg.mxu0
      %v1008 = vadd.f32 %v913, %v1003
      %v1009 = vld [vmem:[#allocation2 + $0x4] sm:$0x1]
      %v1010 = vld [vmem:[#allocation2 + $0xc] sm:$0x1]
      %v1011 = vld [vmem:[#allocation2 + $0x14] sm:$0x1]
      %v1012 = vld [vmem:[#allocation2 + $0x1c] sm:$0x1]
      %v1013 = vld [vmem:[#allocation2 + $0x24] sm:$0x1]
      %v1014 = vld [vmem:[#allocation2 + $0x2c] sm:$0x1]
      %v1015 = vld [vmem:[#allocation2 + $0x34] sm:$0x1]
      %v1016 = vld [vmem:[#allocation2 + $0x3c] sm:$0x1]
      %v1017 = vld [vmem:[%s1 + $0x10] sm:$0xf]
      %v1018 = vpack.c.bf16 %v1009, %v1009
      %v1019 = vpack.c.bf16 %v1010, %v1010
      %v1020 = vpack.c.bf16 %v1011, %v1011
      %v1021 = vpack.c.bf16 %v1012, %v1012
      %v1022 = vpack.c.bf16 %v1013, %v1013
      %v1023 = vpack.c.bf16 %v1014, %v1014
      %v1024 = vpack.c.bf16 %v1015, %v1015
      %v1025 = vpack.c.bf16 %v1016, %v1016
      %v1034 = vunpack.c.l.b16 %v1018
      %v1035 = vunpack.c.l.b16 %v1019
      %v1036 = vunpack.c.l.b16 %v1020
      %v1037 = vunpack.c.l.b16 %v1021
      %v1038 = vunpack.c.l.b16 %v1022
      %v1039 = vunpack.c.l.b16 %v1023
      %v1040 = vunpack.c.l.b16 %v1024
      %v1041 = vunpack.c.l.b16 %v1025
      %v1042 = vrot.slane %v1035, 7
      %v1043 = vsel %vm674, %v1042, %v1034
      %v1044 = vrot.slane %v1036, 6
      %v1045 = vsel %vm677, %v1044, %v1043
      %v1046 = vrot.slane %v1037, 5
      %v1047 = vsel %vm680, %v1046, %v1045
      %v1048 = vrot.slane %v1038, 4
      %v1049 = vsel %vm683, %v1048, %v1047
      %v1050 = vrot.slane %v1039, 3
      %v1051 = vsel %vm686, %v1050, %v1049
      %v1052 = vrot.slane %v1040, 2
      %v1053 = vsel %vm689, %v1052, %v1051
      %v1054 = vrot.slane %v1041, 1
      %v1055 = vsel %vm692, %v1054, %v1053
      %v1056 = vpack.c.b16 %v1055, %v1055
      %v1058 = vsel %vm614, %v1056, 0
      %v1061 = vsel %vm698, %v1017, 0
      %1063 = vmatprep.subr.bf16.mxu0 0
      %1064 = vmatpush1.bf16.msra.mxu0 %v1061
      %1065 = vmatprep.subr.bf16.mxu0 0
      %1066 = vmatpush1.bf16.msra.mxu0 0
      %1067 = vmatprep.subr.bf16.mxu0 0
      %1068 = vmatpush1.bf16.msra.mxu0 0
      %1069 = vmatprep.subr.bf16.mxu0 0
      %1070 = vmatpush1.bf16.msra.mxu0 0
      %1071 = vmatprep.subr.bf16.mxu0 0
      %1072 = vmatpush1.bf16.msra.mxu0 0
      %1073 = vmatprep.subr.bf16.mxu0 0
      %1074 = vmatpush1.bf16.msra.mxu0 0
      %1075 = vmatprep.subr.bf16.mxu0 0
      %1076 = vmatpush1.bf16.msra.mxu0 0
      %1077 = vmatprep.subr.bf16.mxu0 0
      %1078 = vmatpush1.bf16.msra.mxu0 0
      %1079 = vmatprep.subr.bf16.mxu0 0
      %1080 = vmatpush1.bf16.msra.mxu0 0
      %1081 = vmatprep.subr.bf16.mxu0 0
      %1082 = vmatpush1.bf16.msra.mxu0 0
      %1083 = vmatprep.subr.bf16.mxu0 0
      %1084 = vmatpush1.bf16.msra.mxu0 0
      %1085 = vmatprep.subr.bf16.mxu0 0
      %1086 = vmatpush1.bf16.msra.mxu0 0
      %1087 = vmatprep.subr.bf16.mxu0 0
      %1088 = vmatpush1.bf16.msra.mxu0 0
      %1089 = vmatprep.subr.bf16.mxu0 0
      %1090 = vmatpush1.bf16.msra.mxu0 0
      %1091 = vmatprep.subr.bf16.mxu0 0
      %1092 = vmatpush1.bf16.msra.mxu0 0
      %1093 = vmatprep.subr.bf16.mxu0 0
      %1094 = vmatpush1.bf16.msra.mxu0 0
      %1095 = vmatprep.mubr.bf16.mxu0 0
      %1096 = vmatmul.mubr.bf16.gmra.mrb[0].mxu0 %v1058
      %v1097 = vpop.f32.mrb[0].mxu0
      %v1098 = vadd.f32 0.0, %v1097
      %v1099 = vpop.f32.mrb[0].mxu0
      %v1100 = vpop.f32.mrb[0].mxu0
      %v1101 = vpop.f32.mrb[0].mxu0
      %1102 = vdwg.mxu0
      %v1103 = vadd.f32 %v1008, %v1098
      %v1104 = vld [vmem:[#allocation2 + $0x5] sm:$0x1]
      %v1105 = vld [vmem:[#allocation2 + $0xd] sm:$0x1]
      %v1106 = vld [vmem:[#allocation2 + $0x15] sm:$0x1]
      %v1107 = vld [vmem:[#allocation2 + $0x1d] sm:$0x1]
      %v1108 = vld [vmem:[#allocation2 + $0x25] sm:$0x1]
      %v1109 = vld [vmem:[#allocation2 + $0x2d] sm:$0x1]
      %v1110 = vld [vmem:[#allocation2 + $0x35] sm:$0x1]
      %v1111 = vld [vmem:[#allocation2 + $0x3d] sm:$0x1]
      %v1112 = vld [vmem:[%s1 + $0x14] sm:$0xf]
      %v1113 = vpack.c.bf16 %v1104, %v1104
      %v1114 = vpack.c.bf16 %v1105, %v1105
      %v1115 = vpack.c.bf16 %v1106, %v1106
      %v1116 = vpack.c.bf16 %v1107, %v1107
      %v1117 = vpack.c.bf16 %v1108, %v1108
      %v1118 = vpack.c.bf16 %v1109, %v1109
      %v1119 = vpack.c.bf16 %v1110, %v1110
      %v1120 = vpack.c.bf16 %v1111, %v1111
      %v1129 = vunpack.c.l.b16 %v1113
      %v1130 = vunpack.c.l.b16 %v1114
      %v1131 = vunpack.c.l.b16 %v1115
      %v1132 = vunpack.c.l.b16 %v1116
      %v1133 = vunpack.c.l.b16 %v1117
      %v1134 = vunpack.c.l.b16 %v1118
      %v1135 = vunpack.c.l.b16 %v1119
      %v1136 = vunpack.c.l.b16 %v1120
      %v1137 = vrot.slane %v1130, 7
      %v1138 = vsel %vm674, %v1137, %v1129
      %v1139 = vrot.slane %v1131, 6
      %v1140 = vsel %vm677, %v1139, %v1138
      %v1141 = vrot.slane %v1132, 5
      %v1142 = vsel %vm680, %v1141, %v1140
      %v1143 = vrot.slane %v1133, 4
      %v1144 = vsel %vm683, %v1143, %v1142
      %v1145 = vrot.slane %v1134, 3
      %v1146 = vsel %vm686, %v1145, %v1144
      %v1147 = vrot.slane %v1135, 2
      %v1148 = vsel %vm689, %v1147, %v1146
      %v1149 = vrot.slane %v1136, 1
      %v1150 = vsel %vm692, %v1149, %v1148
      %v1151 = vpack.c.b16 %v1150, %v1150
      %v1153 = vsel %vm614, %v1151, 0
      %v1156 = vsel %vm698, %v1112, 0
      %1158 = vmatprep.subr.bf16.mxu0 0
      %1159 = vmatpush1.bf16.msra.mxu0 %v1156
      %1160 = vmatprep.subr.bf16.mxu0 0
      %1161 = vmatpush1.bf16.msra.mxu0 0
      %1162 = vmatprep.subr.bf16.mxu0 0
      %1163 = vmatpush1.bf16.msra.mxu0 0
      %1164 = vmatprep.subr.bf16.mxu0 0
      %1165 = vmatpush1.bf16.msra.mxu0 0
      %1166 = vmatprep.subr.bf16.mxu0 0
      %1167 = vmatpush1.bf16.msra.mxu0 0
      %1168 = vmatprep.subr.bf16.mxu0 0
      %1169 = vmatpush1.bf16.msra.mxu0 0
      %1170 = vmatprep.subr.bf16.mxu0 0
      %1171 = vmatpush1.bf16.msra.mxu0 0
      %1172 = vmatprep.subr.bf16.mxu0 0
      %1173 = vmatpush1.bf16.msra.mxu0 0
      %1174 = vmatprep.subr.bf16.mxu0 0
      %1175 = vmatpush1.bf16.msra.mxu0 0
      %1176 = vmatprep.subr.bf16.mxu0 0
      %1177 = vmatpush1.bf16.msra.mxu0 0
      %1178 = vmatprep.subr.bf16.mxu0 0
      %1179 = vmatpush1.bf16.msra.mxu0 0
      %1180 = vmatprep.subr.bf16.mxu0 0
      %1181 = vmatpush1.bf16.msra.mxu0 0
      %1182 = vmatprep.subr.bf16.mxu0 0
      %1183 = vmatpush1.bf16.msra.mxu0 0
      %1184 = vmatprep.subr.bf16.mxu0 0
      %1185 = vmatpush1.bf16.msra.mxu0 0
      %1186 = vmatprep.subr.bf16.mxu0 0
      %1187 = vmatpush1.bf16.msra.mxu0 0
      %1188 = vmatprep.subr.bf16.mxu0 0
      %1189 = vmatpush1.bf16.msra.mxu0 0
      %1190 = vmatprep.mubr.bf16.mxu0 0
      %1191 = vmatmul.mubr.bf16.gmra.mrb[0].mxu0 %v1153
      %v1192 = vpop.f32.mrb[0].mxu0
      %v1193 = vadd.f32 0.0, %v1192
      %v1194 = vpop.f32.mrb[0].mxu0
      %v1195 = vpop.f32.mrb[0].mxu0
      %v1196 = vpop.f32.mrb[0].mxu0
      %1197 = vdwg.mxu0
      %v1198 = vadd.f32 %v1103, %v1193
      %v1199 = vld [vmem:[#allocation2 + $0x6] sm:$0x1]
      %v1200 = vld [vmem:[#allocation2 + $0xe] sm:$0x1]
      %v1201 = vld [vmem:[#allocation2 + $0x16] sm:$0x1]
      %v1202 = vld [vmem:[#allocation2 + $0x1e] sm:$0x1]
      %v1203 = vld [vmem:[#allocation2 + $0x26] sm:$0x1]
      %v1204 = vld [vmem:[#allocation2 + $0x2e] sm:$0x1]
      %v1205 = vld [vmem:[#allocation2 + $0x36] sm:$0x1]
      %v1206 = vld [vmem:[#allocation2 + $0x3e] sm:$0x1]
      %v1207 = vld [vmem:[%s1 + $0x18] sm:$0xf]
      %v1208 = vpack.c.bf16 %v1199, %v1199
      %v1209 = vpack.c.bf16 %v1200, %v1200
      %v1210 = vpack.c.bf16 %v1201, %v1201
      %v1211 = vpack.c.bf16 %v1202, %v1202
      %v1212 = vpack.c.bf16 %v1203, %v1203
      %v1213 = vpack.c.bf16 %v1204, %v1204
      %v1214 = vpack.c.bf16 %v1205, %v1205
      %v1215 = vpack.c.bf16 %v1206, %v1206
      %v1224 = vunpack.c.l.b16 %v1208
      %v1225 = vunpack.c.l.b16 %v1209
      %v1226 = vunpack.c.l.b16 %v1210
      %v1227 = vunpack.c.l.b16 %v1211
      %v1228 = vunpack.c.l.b16 %v1212
      %v1229 = vunpack.c.l.b16 %v1213
      %v1230 = vunpack.c.l.b16 %v1214
      %v1231 = vunpack.c.l.b16 %v1215
      %v1232 = vrot.slane %v1225, 7
      %v1233 = vsel %vm674, %v1232, %v1224
      %v1234 = vrot.slane %v1226, 6
      %v1235 = vsel %vm677, %v1234, %v1233
      %v1236 = vrot.slane %v1227, 5
      %v1237 = vsel %vm680, %v1236, %v1235
      %v1238 = vrot.slane %v1228, 4
      %v1239 = vsel %vm683, %v1238, %v1237
      %v1240 = vrot.slane %v1229, 3
      %v1241 = vsel %vm686, %v1240, %v1239
      %v1242 = vrot.slane %v1230, 2
      %v1243 = vsel %vm689, %v1242, %v1241
      %v1244 = vrot.slane %v1231, 1
      %v1245 = vsel %vm692, %v1244, %v1243
      %v1246 = vpack.c.b16 %v1245, %v1245
      %v1248 = vsel %vm614, %v1246, 0
      %v1251 = vsel %vm698, %v1207, 0
      %1253 = vmatprep.subr.bf16.mxu0 0
      %1254 = vmatpush1.bf16.msra.mxu0 %v1251
      %1255 = vmatprep.subr.bf16.mxu0 0
      %1256 = vmatpush1.bf16.msra.mxu0 0
      %1257 = vmatprep.subr.bf16.mxu0 0
      %1258 = vmatpush1.bf16.msra.mxu0 0
      %1259 = vmatprep.subr.bf16.mxu0 0
      %1260 = vmatpush1.bf16.msra.mxu0 0
      %1261 = vmatprep.subr.bf16.mxu0 0
      %1262 = vmatpush1.bf16.msra.mxu0 0
      %1263 = vmatprep.subr.bf16.mxu0 0
      %1264 = vmatpush1.bf16.msra.mxu0 0
      %1265 = vmatprep.subr.bf16.mxu0 0
      %1266 = vmatpush1.bf16.msra.mxu0 0
      %1267 = vmatprep.subr.bf16.mxu0 0
      %1268 = vmatpush1.bf16.msra.mxu0 0
      %1269 = vmatprep.subr.bf16.mxu0 0
      %1270 = vmatpush1.bf16.msra.mxu0 0
      %1271 = vmatprep.subr.bf16.mxu0 0
      %1272 = vmatpush1.bf16.msra.mxu0 0
      %1273 = vmatprep.subr.bf16.mxu0 0
      %1274 = vmatpush1.bf16.msra.mxu0 0
      %1275 = vmatprep.subr.bf16.mxu0 0
      %1276 = vmatpush1.bf16.msra.mxu0 0
      %1277 = vmatprep.subr.bf16.mxu0 0
      %1278 = vmatpush1.bf16.msra.mxu0 0
      %1279 = vmatprep.subr.bf16.mxu0 0
      %1280 = vmatpush1.bf16.msra.mxu0 0
      %1281 = vmatprep.subr.bf16.mxu0 0
      %1282 = vmatpush1.bf16.msra.mxu0 0
      %1283 = vmatprep.subr.bf16.mxu0 0
      %1284 = vmatpush1.bf16.msra.mxu0 0
      %1285 = vmatprep.mubr.bf16.mxu0 0
      %1286 = vmatmul.mubr.bf16.gmra.mrb[0].mxu0 %v1248
      %v1287 = vpop.f32.mrb[0].mxu0
      %v1288 = vadd.f32 0.0, %v1287
      %v1289 = vpop.f32.mrb[0].mxu0
      %v1290 = vpop.f32.mrb[0].mxu0
      %v1291 = vpop.f32.mrb[0].mxu0
      %1292 = vdwg.mxu0
      %v1293 = vadd.f32 %v1198, %v1288
      %v1294 = vld [vmem:[#allocation2 + $0x7] sm:$0x1]
      %v1295 = vld [vmem:[#allocation2 + $0xf] sm:$0x1]
      %v1296 = vld [vmem:[#allocation2 + $0x17] sm:$0x1]
      %v1297 = vld [vmem:[#allocation2 + $0x1f] sm:$0x1]
      %v1298 = vld [vmem:[#allocation2 + $0x27] sm:$0x1]
      %v1299 = vld [vmem:[#allocation2 + $0x2f] sm:$0x1]
      %v1300 = vld [vmem:[#allocation2 + $0x37] sm:$0x1]
      %v1301 = vld [vmem:[#allocation2 + $0x3f] sm:$0x1]
      %v1302 = vld [vmem:[%s1 + $0x1c] sm:$0xf]
      %v1303 = vpack.c.bf16 %v1294, %v1294
      %v1304 = vpack.c.bf16 %v1295, %v1295
      %v1305 = vpack.c.bf16 %v1296, %v1296
      %v1306 = vpack.c.bf16 %v1297, %v1297
      %v1307 = vpack.c.bf16 %v1298, %v1298
      %v1308 = vpack.c.bf16 %v1299, %v1299
      %v1309 = vpack.c.bf16 %v1300, %v1300
      %v1310 = vpack.c.bf16 %v1301, %v1301
      %v1319 = vunpack.c.l.b16 %v1303
      %v1320 = vunpack.c.l.b16 %v1304
      %v1321 = vunpack.c.l.b16 %v1305
      %v1322 = vunpack.c.l.b16 %v1306
      %v1323 = vunpack.c.l.b16 %v1307
      %v1324 = vunpack.c.l.b16 %v1308
      %v1325 = vunpack.c.l.b16 %v1309
      %v1326 = vunpack.c.l.b16 %v1310
      %v1327 = vrot.slane %v1320, 7
      %v1328 = vsel %vm674, %v1327, %v1319
      %v1329 = vrot.slane %v1321, 6
      %v1330 = vsel %vm677, %v1329, %v1328
      %v1331 = vrot.slane %v1322, 5
      %v1332 = vsel %vm680, %v1331, %v1330
      %v1333 = vrot.slane %v1323, 4
      %v1334 = vsel %vm683, %v1333, %v1332
      %v1335 = vrot.slane %v1324, 3
      %v1336 = vsel %vm686, %v1335, %v1334
      %v1337 = vrot.slane %v1325, 2
      %v1338 = vsel %vm689, %v1337, %v1336
      %v1339 = vrot.slane %v1326, 1
      %v1340 = vsel %vm692, %v1339, %v1338
      %v1341 = vpack.c.b16 %v1340, %v1340
      %v1343 = vsel %vm614, %v1341, 0
      %v1346 = vsel %vm698, %v1302, 0
      %1348 = vmatprep.subr.bf16.mxu0 0
      %1349 = vmatpush1.bf16.msra.mxu0 %v1346
      %1350 = vmatprep.subr.bf16.mxu0 0
      %1351 = vmatpush1.bf16.msra.mxu0 0
      %1352 = vmatprep.subr.bf16.mxu0 0
      %1353 = vmatpush1.bf16.msra.mxu0 0
      %1354 = vmatprep.subr.bf16.mxu0 0
      %1355 = vmatpush1.bf16.msra.mxu0 0
      %1356 = vmatprep.subr.bf16.mxu0 0
      %1357 = vmatpush1.bf16.msra.mxu0 0
      %1358 = vmatprep.subr.bf16.mxu0 0
      %1359 = vmatpush1.bf16.msra.mxu0 0
      %1360 = vmatprep.subr.bf16.mxu0 0
      %1361 = vmatpush1.bf16.msra.mxu0 0
      %1362 = vmatprep.subr.bf16.mxu0 0
      %1363 = vmatpush1.bf16.msra.mxu0 0
      %1364 = vmatprep.subr.bf16.mxu0 0
      %1365 = vmatpush1.bf16.msra.mxu0 0
      %1366 = vmatprep.subr.bf16.mxu0 0
      %1367 = vmatpush1.bf16.msra.mxu0 0
      %1368 = vmatprep.subr.bf16.mxu0 0
      %1369 = vmatpush1.bf16.msra.mxu0 0
      %1370 = vmatprep.subr.bf16.mxu0 0
      %1371 = vmatpush1.bf16.msra.mxu0 0
      %1372 = vmatprep.subr.bf16.mxu0 0
      %1373 = vmatpush1.bf16.msra.mxu0 0
      %1374 = vmatprep.subr.bf16.mxu0 0
      %1375 = vmatpush1.bf16.msra.mxu0 0
      %1376 = vmatprep.subr.bf16.mxu0 0
      %1377 = vmatpush1.bf16.msra.mxu0 0
      %1378 = vmatprep.subr.bf16.mxu0 0
      %1379 = vmatpush1.bf16.msra.mxu0 0
      %1380 = vmatprep.mubr.bf16.mxu0 0
      %1381 = vmatmul.mubr.bf16.gmra.mrb[0].mxu0 %v1343
      %v1382 = vpop.f32.mrb[0].mxu0
      %v1383 = vadd.f32 0.0, %v1382
      %v1384 = vpop.f32.mrb[0].mxu0
      %v1385 = vpop.f32.mrb[0].mxu0
      %v1386 = vpop.f32.mrb[0].mxu0
      %1387 = vdwg.mxu0
      %v1388 = vadd.f32 %v1293, %v1383
      %v1389 = vld [vmem:[%s2] sm:$0x1]
      %v1391 = vlaneseq
      %v1392 = vshrl.u32 %v1391, 7
      %v1393 = vsub.s32 0, %v1392
      %v1394 = vrot.slane %v1389, %v1393
      %v1396 = vadd.f32 %v1388, %v1394
      %v1397 = vmax.f32 %v1396, 0.0
      %v1398 = vld [vmem:[%s3] sm:$0xf]
      %v1399 = vld [vmem:[%s3 + $0x4] sm:$0xf]
      %v1400 = vld [vmem:[%s3 + $0x8] sm:$0xf]
      %v1401 = vld [vmem:[%s3 + $0xc] sm:$0xf]
      %v1402 = vpack.c.bf16 %v1397, %v1397
      %v1403 = vld [vmem:[%s4] sm:$0x1]
      %v1405 = vlaneseq
      %v1406 = vshrl.u32 %v1405, 7
      %v1407 = vsub.s32 0, %v1406
      %v1408 = vrot.slane %v1403, %v1407
      %v1414 = vunpack.c.l.b16 %v1398
      %v1415 = vunpack.c.l.b16 %v1399
      %v1416 = vunpack.c.l.b16 %v1400
      %v1417 = vunpack.c.l.b16 %v1401
      %v1418 = vpack.c.b16 %v1415, %v1414
      %v1419 = vpack.c.b16 %v1417, %v1416
      %vm1422 = vcmask 261120
      %v1424 = vsel %vm1422, %v1402, 0
      %1426 = vmatprep.subr.bf16.mxu0 0
      %1427 = vmatpush1.bf16.msra.mxu0 %v1418
      %1428 = vmatprep.subr.bf16.mxu0 0
      %1429 = vmatpush1.bf16.msra.mxu0 %v1419
      %1430 = vmatprep.subr.bf16.mxu0 0
      %1431 = vmatpush1.bf16.msra.mxu0 0
      %1432 = vmatprep.subr.bf16.mxu0 0
      %1433 = vmatpush1.bf16.msra.mxu0 0
      %1434 = vmatprep.subr.bf16.mxu0 0
      %1435 = vmatpush1.bf16.msra.mxu0 0
      %1436 = vmatprep.subr.bf16.mxu0 0
      %1437 = vmatpush1.bf16.msra.mxu0 0
      %1438 = vmatprep.subr.bf16.mxu0 0
      %1439 = vmatpush1.bf16.msra.mxu0 0
      %1440 = vmatprep.subr.bf16.mxu0 0
      %1441 = vmatpush1.bf16.msra.mxu0 0
      %1442 = vmatprep.subr.bf16.mxu0 0
      %1443 = vmatpush1.bf16.msra.mxu0 0
      %1444 = vmatprep.subr.bf16.mxu0 0
      %1445 = vmatpush1.bf16.msra.mxu0 0
      %1446 = vmatprep.subr.bf16.mxu0 0
      %1447 = vmatpush1.bf16.msra.mxu0 0
      %1448 = vmatprep.subr.bf16.mxu0 0
      %1449 = vmatpush1.bf16.msra.mxu0 0
      %1450 = vmatprep.subr.bf16.mxu0 0
      %1451 = vmatpush1.bf16.msra.mxu0 0
      %1452 = vmatprep.subr.bf16.mxu0 0
      %1453 = vmatpush1.bf16.msra.mxu0 0
      %1454 = vmatprep.subr.bf16.mxu0 0
      %1455 = vmatpush1.bf16.msra.mxu0 0
      %1456 = vmatprep.subr.bf16.mxu0 0
      %1457 = vmatpush1.bf16.msra.mxu0 0
      %1458 = vmatprep.mubr.bf16.mxu0 0
      %1459 = vmatmul.mubr.bf16.gmra.mrb[0].mxu0 %v1424
      %v1460 = vpop.f32.mrb[0].mxu0
      %v1461 = vadd.f32 %v1408, %v1460
      %v1462 = vpop.f32.mrb[0].mxu0
      %v1463 = vpop.f32.mrb[0].mxu0
      %v1464 = vpop.f32.mrb[0].mxu0
      %1465 = vdwg.mxu0
      %v1466 = vmax.f32 %v1461, 0.0
      %v1467 = vld [vmem:[%s5] sm:$0xf]
      %v1468 = vld [vmem:[%s5 + $0x4] sm:$0xf]
      %v1469 = vpack.c.bf16 %v1466, %v1466
      %v1472 = vunpack.c.l.b16 %v1467
      %v1473 = vunpack.c.l.b16 %v1468
      %v1474 = vpack.c.b16 %v1473, %v1472
      %vm1476 = vcmask 130048
      %v1478 = vsel %vm1476, %v1469, 0
      %1480 = vmatprep.subr.bf16.mxu0 0
      %1481 = vmatpush1.bf16.msra.mxu0 %v1474
      %1482 = vmatprep.subr.bf16.mxu0 0
      %1483 = vmatpush1.bf16.msra.mxu0 0
      %1484 = vmatprep.subr.bf16.mxu0 0
      %1485 = vmatpush1.bf16.msra.mxu0 0
      %1486 = vmatprep.subr.bf16.mxu0 0
      %1487 = vmatpush1.bf16.msra.mxu0 0
      %1488 = vmatprep.subr.bf16.mxu0 0
      %1489 = vmatpush1.bf16.msra.mxu0 0
      %1490 = vmatprep.subr.bf16.mxu0 0
      %1491 = vmatpush1.bf16.msra.mxu0 0
      %1492 = vmatprep.subr.bf16.mxu0 0
      %1493 = vmatpush1.bf16.msra.mxu0 0
      %1494 = vmatprep.subr.bf16.mxu0 0
      %1495 = vmatpush1.bf16.msra.mxu0 0
      %1496 = vmatprep.subr.bf16.mxu0 0
      %1497 = vmatpush1.bf16.msra.mxu0 0
      %1498 = vmatprep.subr.bf16.mxu0 0
      %1499 = vmatpush1.bf16.msra.mxu0 0
      %1500 = vmatprep.subr.bf16.mxu0 0
      %1501 = vmatpush1.bf16.msra.mxu0 0
      %1502 = vmatprep.subr.bf16.mxu0 0
      %1503 = vmatpush1.bf16.msra.mxu0 0
      %1504 = vmatprep.subr.bf16.mxu0 0
      %1505 = vmatpush1.bf16.msra.mxu0 0
      %1506 = vmatprep.subr.bf16.mxu0 0
      %1507 = vmatpush1.bf16.msra.mxu0 0
      %1508 = vmatprep.subr.bf16.mxu0 0
      %1509 = vmatpush1.bf16.msra.mxu0 0
      %1510 = vmatprep.subr.bf16.mxu0 0
      %1511 = vmatpush1.bf16.msra.mxu0 0
      %1512 = vmatprep.mubr.bf16.mxu0 0
      %1513 = vmatmul.mubr.bf16.gmra.mrb[0].mxu0 %v1478
      %v1514 = vpop.f32.mrb[0].mxu0
      %v1515 = vadd.f32 0.0, %v1514
      %v1516 = vpop.f32.mrb[0].mxu0
      %v1517 = vpop.f32.mrb[0].mxu0
      %v1518 = vpop.f32.mrb[0].mxu0
      %1519 = vdwg.mxu0
      %1520 = vst [vmem:[%s251] sm:$0xff] %v1515
      %p1521 = scmp.lt.s32.totalorder %s17, 1
      %s1522 = scalar_select %p1521, %s17, 1
      %s1523 = smul.addr %s1522, 8
      %s1524 = scalar_lea.vmem %s6, %s1523
      // Predicated region
      $region45: #{gecnvnet_forward.3} parent=43 // pred_check
        %p1525 = pneg %p166
      $region46: #{gecnvnet_forward.3} parent=43 // pred_check_branch
        %1527 = sbr.rel (%p1525) target = $region48
      $region47: #{gecnvnet_forward.3} parent=43 // pred_region
        _
      $region48: #{gecnvnet_forward.3} parent=43 // pred_fallthru
        _
    $region44: #{gecnvnet_forward.3} parent=5 // pred_fallthru
      _
    %p1528 = scmp.le.s32.totalorder 2, %s12
    // Predicated region
    $region49: #{gecnvnet_forward.3} parent=5 // pred_check
      %p1529 = pneg %p1528
    $region50: #{gecnvnet_forward.3} parent=5 // pred_check_branch
      %1531 = sbr.rel (%p1529) target = $region52
    $region51: #{gecnvnet_forward.3} parent=5 // pred_region
      %s1532 = ssub.s32 %s12, 2
      // Predicated region
      $region53: #{gecnvnet_forward.3} parent=51 // pred_check
        %p1533 = pneg %p172
      $region54: #{gecnvnet_forward.3} parent=51 // pred_check_branch
        %1535 = sbr.rel (%p1533) target = $region56
      $region55: #{gecnvnet_forward.3} parent=51 // pred_region
        %p1536 = scmp.lt.s32.totalorder %s18, 1
        %s1537 = scalar_select %p1536, %s18, 1
        %s1538 = smul.addr %s1537, 8
        %s1539 = scalar_lea.vmem %s6, %s1538
      $region56: #{gecnvnet_forward.3} parent=51 // pred_fallthru
        _
    $region52: #{gecnvnet_forward.3} parent=5 // pred_fallthru
      _
  $region6: #{gecnvnet_forward.3} parent=0 // loop_footer
    %s16 = sadd.s32 1, %s12
  $region7: #{gecnvnet_forward.3} parent=0 // loop_footer_branch
    %11 = sbr.rel target = $region3
  $region8: #{gecnvnet_forward.3} parent=0 // loop_exit
    _

</llo_original>
